<compile_context>
chip_gen: v6e
topology: v6e:2x2x1
jax: 0.10.0
libtpu: 0.0.40
codegen_flags: <defaults>
</compile_context>

<pallas_src>
import functools

import jax
import jax.numpy as jnp
from jax.experimental import pallas as pl
from jax.experimental.pallas import tpu as pltpu

_NUM_DIST_BINS = 17          # clip(i - j, -8, 8)  ->  17 one-hot bins
_PADDED_BINS = 32            # zero-padded so the MXU operand is nicely aligned
_VMEM_LIMIT_BYTES = 48 * 1024 * 1024   # fits every generation, incl. v7x's 64 MiB physical


def _pairwise_embeddings_kernel(x_ref, w_p_ref, b_p_ref, w_q_ref, b_q_ref,
                                w_out_ref, w_pos_ref, bias_ref, out_ref, hp_ref,
                                *, tr, row_tiles_per_split):
    """One (batch, core-split, row-tile) grid step.

    x_ref    : (1, Lp, Hd)  cdt   inputs_embeds slab for this batch element (resident)
    w_p/w_q  : (Hd, AA)     cdt   in_proj weight expanded along p / q of the outer product
    b_p/b_q  : (1, AA)      f32   matching expanded in_proj biases
    w_out    : (AA, P)      cdt   out_proj weight
    w_pos    : (32, P)      cdt   position-embedding table, rows >= 17 are zero
    bias     : (1, P)       f32   b_out + b_pos (folded)
    out_ref  : (1, tr*Lp, P)      rows i*Lp + j of the (Lp*Lp, P) pairwise output
    hp_ref   : (Lp, AA)     cdt   per-batch scratch:  hp[j, p*A+q] = h[j, p]
    """
    Lp = x_ref.shape[1]
    AA = w_p_ref.shape[1]
    NB = w_pos_ref.shape[0]
    cdt = hp_ref.dtype
    f32 = jnp.float32

    c = pl.program_id(1)
    r = pl.program_id(2)

    # hp depends only on the batch element: fill it once per (batch, core-split) pair.
    # CORRECTNESS: this relies on the innermost grid axis being "arbitrary" (sequential per
    # core) while only the outer axes may be megacore-sharded -- see assert in the wrapper.
    @pl.when(r == 0)
    def _():
        hp = jnp.dot(x_ref[0], w_p_ref[...], preferred_element_type=f32) + b_p_ref[...]
        hp_ref[...] = hp.astype(cdt)

    i0 = pl.multiple_of((c * row_tiles_per_split + r) * tr, tr)   # first global row of tile

    # hq for just the tr rows of this tile (recomputed tiny matmul, no persistent scratch).
    x_rows = x_ref[0, pl.ds(i0, tr), :]                           # (tr, Hd)
    hq_i = (jnp.dot(x_rows, w_q_ref[...], preferred_element_type=f32)
            + b_q_ref[...]).astype(cdt)                           # hq_i[ii, p*A+q] = h[i0+ii, q]

    # Flattened outer product:  t2[ii*Lp + j, p*A + q] = h[i0+ii, q] * h[j, p]
    hp = hp_ref[...]                                              # (Lp, AA)
    t2 = (hq_i[:, None, :] * hp[None, :, :]).reshape(tr * Lp, AA)

    # out_proj contraction on the MXU, f32 accumulation.
    acc = jnp.dot(t2, w_out_ref[...], preferred_element_type=f32)  # (tr*Lp, P)

    # Relative-position embedding: one-hot of clip(i-j,-8,8)+8 built in-kernel (pure index
    # bookkeeping, zero HBM traffic), contracted against the zero-padded table.
    ii = jax.lax.broadcasted_iota(jnp.int32, (tr, Lp, NB), 0)
    jj = jax.lax.broadcasted_iota(jnp.int32, (tr, Lp, NB), 1)
    bb = jax.lax.broadcasted_iota(jnp.int32, (tr, Lp, NB), 2)
    d = jnp.clip(i0 + ii - jj, -8, 8) + 8
    onehot = (d == bb).astype(cdt).reshape(tr * Lp, NB)
    acc = acc + jnp.dot(onehot, w_pos_ref[...], preferred_element_type=f32)

    # Folded (b_out + b_pos) bias, single store of the whole tile.
    out_ref[0] = (acc + bias_ref[...]).astype(out_ref.dtype)


def _divisors_desc(n):
    return [d for d in range(n, 0, -1) if n % d == 0]


def _vmem_bytes(tr, Lp, Hd, AA, P, cb, xb, ob):
    """Rough VMEM footprint (bytes) for a row tile of size tr.

    Pipelined inputs are double-buffered even when their block index never changes, so a
    factor 2 is applied to all of them (instead of relying on pl.Buffered(1) support).
    """
    NB = _PADDED_BINS
    fixed = (2 * Lp * Hd * xb              # x slab (input block, 2 buffers)
             + 2 * 2 * Hd * AA * cb        # expanded in_proj weights (p / q), 2 buffers
             + 2 * (AA + NB) * P * cb      # out_proj + position weights, 2 buffers
             + 2 * (2 * AA + P) * 4        # biases (f32), 2 buffers
             + Lp * AA * cb)               # hp scratch (single buffer)
    tile = (2 * tr * Lp * P * ob           # output block, 2 buffers
            + tr * Lp * AA * cb            # t2 intermediate
            + tr * Lp * NB * cb            # in-kernel one-hot
            + 2 * tr * Lp * P * 4          # f32 accumulator / position partials
            + tr * (Hd + 2 * AA) * 4)      # hq_i and the sliced x rows
    return fixed + tile


def _choose_tiling(batch, Lp, Hd, AA, P, cb, xb, ob, budget_bytes):
    feasible = [tr for tr in _divisors_desc(Lp)
                if _vmem_bytes(tr, Lp, Hd, AA, P, cb, xb, ob) <= budget_bytes]
    if not feasible:
        # TODO(synk): j-chunk the (tr*Lp, AA) intermediate instead of degrading to tr=1.
        feasible = [1]
    tr = feasible[0]
    if batch == 1 and Lp // tr < 2:
        # Keep >= 2 row tiles so the parallel split below can feed both v7x TensorCores
        # even for single-sequence inference.
        for cand in feasible:
            if Lp // cand >= 2:
                tr = cand
                break
    n_row_tiles = Lp // tr
    core_split = 2 if (n_row_tiles >= 2 and n_row_tiles % 2 == 0) else 1
    return tr, core_split


def pairwise_embeddings(inputs_embeds, params, *, compute_dtype=jnp.bfloat16, out_dtype=None):
    """inputs_embeds: (B, L, Hd)  ->  (B, L, L, P) pairwise embeddings."""
    B, L, Hd = inputs_embeds.shape
    A = params["w_in"].shape[1]            # pairwise_attention_size
    P = params["w_out"].shape[1]           # pairwise_size
    AA = A * A
    assert params["w_out"].shape[0] == AA
    f32 = jnp.float32
    cdt = jnp.dtype(compute_dtype)
    out_dtype = jnp.dtype(out_dtype) if out_dtype is not None else inputs_embeds.dtype

    # Pad L to the sublane packing of the compute dtype so every BlockSpec / in-kernel
    # reshape stays legal for awkward lengths (e.g. 177); padded rows/cols are sliced off.
    granule = max(8, 32 // cdt.itemsize)
    Lp = -(-L // granule) * granule
    x = inputs_embeds
    if Lp != L:
        x = jnp.pad(x, ((0, 0), (0, Lp - L), (0, 0)))
    x = x.astype(cdt)

    # Fuse in_proj with the (p, q) expansion of the outer product: column k = p*A + q of the
    # expanded weights picks w_in[:, k//A] (p side) / w_in[:, k%A] (q side), so the in-kernel
    # outer product is a plain elementwise multiply of two (·, A*A) projections.
    w_in = params["w_in"].astype(f32)
    b_in = params["b_in"].astype(f32)
    w_p = jnp.repeat(w_in, A, axis=1).astype(cdt)            # (Hd, AA): col k -> w_in[:, k//A]
    w_q = jnp.tile(w_in, (1, A)).astype(cdt)                 # (Hd, AA): col k -> w_in[:, k% A]
    b_p = jnp.repeat(b_in, A).reshape(1, AA)                 # f32
    b_q = jnp.tile(b_in, A).reshape(1, AA)                   # f32
    w_out = params["w_out"].astype(cdt)                      # (AA, P)
    w_pos = jnp.zeros((_PADDED_BINS, P), cdt).at[:_NUM_DIST_BINS].set(
        params["w_pos"].astype(cdt))                         # (32, P), rows >= 17 are zero
    bias = (params["b_out"] + params["b_pos"]).astype(f32).reshape(1, P)

    tr, core_split = _choose_tiling(
        B, Lp, Hd, AA, P,
        cb=cdt.itemsize, xb=cdt.itemsize, ob=jnp.dtype(out_dtype).itemsize,
        budget_bytes=int(0.75 * _VMEM_LIMIT_BYTES))
    n_row_tiles = Lp // tr
    rts = n_row_tiles // core_split        # row tiles per parallel split

    # CORRECTNESS: the hp scratch refill happens under pl.when(program_id(2) == 0); this is
    # only valid while the innermost grid axis is "arbitrary" (sequential per core).
    dim_sem = ("parallel", "parallel", "arbitrary")
    assert dim_sem[-1] == "arbitrary"

    kernel = functools.partial(_pairwise_embeddings_kernel,
                               tr=tr, row_tiles_per_split=rts)

    out = pl.pallas_call(
        kernel,
        out_shape=jax.ShapeDtypeStruct((B, Lp * Lp, P), out_dtype),
        grid_spec=pltpu.PrefetchScalarGridSpec(
            num_scalar_prefetch=0,
            grid=(B, core_split, rts),
            in_specs=[
                pl.BlockSpec((1, Lp, Hd), lambda b, c, r: (b, 0, 0)),       # x slab (per batch)
                pl.BlockSpec((Hd, AA), lambda b, c, r: (0, 0)),             # W_in expanded (p)
                pl.BlockSpec((1, AA), lambda b, c, r: (0, 0)),              # b_in expanded (p)
                pl.BlockSpec((Hd, AA), lambda b, c, r: (0, 0)),             # W_in expanded (q)
                pl.BlockSpec((1, AA), lambda b, c, r: (0, 0)),              # b_in expanded (q)
                pl.BlockSpec((AA, P), lambda b, c, r: (0, 0)),              # W_out
                pl.BlockSpec((_PADDED_BINS, P), lambda b, c, r: (0, 0)),    # W_pos (padded)
                pl.BlockSpec((1, P), lambda b, c, r: (0, 0)),               # b_out + b_pos
            ],
            out_specs=pl.BlockSpec((1, tr * Lp, P),
                                   lambda b, c, r: (b, c * rts + r, 0)),
            scratch_shapes=[pltpu.VMEM((Lp, AA), cdt)],                     # hp (per batch)
        ),
        compiler_params=pltpu.CompilerParams(
            dimension_semantics=dim_sem,
            vmem_limit_bytes=_VMEM_LIMIT_BYTES),
    )(x, w_p, b_p, w_q, b_q, w_out, w_pos, bias)

    out = out.reshape(B, Lp, Lp, P)
    if Lp != L:
        out = out[:, :L, :L, :]
    return out


def reference_forward(x, params):
    """Pure-JAX transcription of the PyTorch forward (for verification)."""
    h = x @ params["w_in"] + params["b_in"]                                # (B, L, A)
    B, L, A = h.shape
    tri = h[:, None, :, :, None] * h[:, :, None, None, :]                  # [b,i,j,p,q] = h[b,j,p]*h[b,i,q]
    tri = tri.reshape(B, L, L, A * A)
    outer = tri @ params["w_out"] + params["b_out"]                        # (B, L, L, P)

    pos_ids = jnp.arange(L)
    d = jnp.clip(pos_ids[:, None] - pos_ids[None, :], -8, 8)               # (L, L)
    onehot = (d[..., None] == jnp.arange(-8, 9)[None, None, :]).astype(x.dtype)
    pos = onehot @ params["w_pos"] + params["b_pos"]                       # (L, L, P)
    return outer + pos[None]


if __name__ == "__main__":
    # Small shapes consistent with the module:
    #   hidden_size=32, pairwise_attention_size=8, pairwise_size=32, seq_len=16, batch=2.
    B, L, Hd, A, P = 2, 16, 32, 8, 32

    key = jax.random.PRNGKey(0)
    ks = jax.random.split(key, 8)
    x = jax.random.normal(ks[0], (B, L, Hd), jnp.float32)
    params = {
        "w_in": 0.1 * jax.random.normal(ks[1], (Hd, A), jnp.float32),
        "b_in": 0.1 * jax.random.normal(ks[2], (A,), jnp.float32),
        "w_out": 0.1 * jax.random.normal(ks[3], (A * A, P), jnp.float32),
        "b_out": 0.1 * jax.random.normal(ks[4], (P,), jnp.float32),
        "w_pos": 0.1 * jax.random.normal(ks[5], (_NUM_DIST_BINS, P), jnp.float32),
        "b_pos": 0.1 * jax.random.normal(ks[6], (P,), jnp.float32),
    }
    ref = reference_forward(x, params)

    # f32 compute path: near-bit-accurate check of the kernel structure.
    out_f32 = jax.block_until_ready(
        pairwise_embeddings(x, params, compute_dtype=jnp.float32))
    assert out_f32.shape == (B, L, L, P), out_f32.shape
    err_f32 = float(jnp.max(jnp.abs(out_f32 - ref)))
    assert err_f32 < 1e-3, f"f32 max abs error {err_f32}"

    # Default bf16-MXU path (f32 accumulation): looser tolerance for bf16 operands.
    out_bf16 = jax.block_until_ready(pairwise_embeddings(x, params))
    assert out_bf16.shape == (B, L, L, P), out_bf16.shape
    err_bf16 = float(jnp.max(jnp.abs(out_bf16.astype(jnp.float32) - ref)))
    assert err_bf16 < 5e-2, f"bf16 max abs error {err_bf16}"

    # Non-sublane-aligned sequence length exercises the padding path.
    L2 = 10
    x2 = jax.random.normal(ks[7], (B, L2, Hd), jnp.float32)
    out2 = jax.block_until_ready(
        pairwise_embeddings(x2, params, compute_dtype=jnp.float32))
    assert out2.shape == (B, L2, L2, P), out2.shape
    err2 = float(jnp.max(jnp.abs(out2 - reference_forward(x2, params))))
    assert err2 < 1e-3, f"padded-L max abs error {err2}"

    print("KERNEL_OK")
</pallas_src>

<mosaic_0001>
module attributes {stable_mosaic.version = 11 : i64} {
  func.func @_pairwise_embeddings_kernel(%arg0: i32, %arg1: i32, %arg2: i32, %arg3: memref<1x16x32xf32, #tpu.memory_space<vmem>>, %arg4: memref<32x64xf32, #tpu.memory_space<vmem>>, %arg5: memref<1x64xf32, #tpu.memory_space<vmem>>, %arg6: memref<32x64xf32, #tpu.memory_space<vmem>>, %arg7: memref<1x64xf32, #tpu.memory_space<vmem>>, %arg8: memref<64x32xf32, #tpu.memory_space<vmem>>, %arg9: memref<32x32xf32, #tpu.memory_space<vmem>>, %arg10: memref<1x32xf32, #tpu.memory_space<vmem>>, %arg11: memref<1x256x32xf32, #tpu.memory_space<vmem>>, %arg12: memref<16x64xf32, #tpu.memory_space<vmem>>) attributes {dimension_semantics = [#tpu.dimension_semantics<parallel>, #tpu.dimension_semantics<parallel>, #tpu.dimension_semantics<arbitrary>], iteration_bounds = array<i64: 2, 1, 1>, scalar_prefetch = 0 : i64, scratch_operands = 1 : i64, tpu.core_type = #tpu.core_type<tc>, window_params = [{transform_indices = @transform_0, window_bounds = array<i64: 1, 16, 32>}, {pipeline_mode = #tpu.pipeline_mode<synchronous>, transform_indices = @transform_1, window_bounds = array<i64: 32, 64>}, {pipeline_mode = #tpu.pipeline_mode<synchronous>, transform_indices = @transform_2, window_bounds = array<i64: 1, 64>}, {pipeline_mode = #tpu.pipeline_mode<synchronous>, transform_indices = @transform_3, window_bounds = array<i64: 32, 64>}, {pipeline_mode = #tpu.pipeline_mode<synchronous>, transform_indices = @transform_4, window_bounds = array<i64: 1, 64>}, {pipeline_mode = #tpu.pipeline_mode<synchronous>, transform_indices = @transform_5, window_bounds = array<i64: 64, 32>}, {pipeline_mode = #tpu.pipeline_mode<synchronous>, transform_indices = @transform_6, window_bounds = array<i64: 32, 32>}, {pipeline_mode = #tpu.pipeline_mode<synchronous>, transform_indices = @transform_7, window_bounds = array<i64: 1, 32>}, {transform_indices = @transform_8, window_bounds = array<i64: 1, 256, 32>}]} {
    %c0_i32 = arith.constant 0 : i32
    %0 = arith.cmpi eq, %arg2, %c0_i32 : i32
    %1 = arith.extui %0 : i1 to i32
    %c0_i32_0 = arith.constant 0 : i32
    %2 = arith.cmpi ne, %1, %c0_i32_0 : i32
    scf.if %2 {
      %c0_20 = arith.constant 0 : index
      %c0_21 = arith.constant 0 : index
      %c0_22 = arith.constant 0 : index
      %49 = vector.load %arg3[%c0_20, %c0_21, %c0_22] : memref<1x16x32xf32, #tpu.memory_space<vmem>>, vector<1x16x32xf32>
      %50 = vector.shape_cast %49 : vector<1x16x32xf32> to vector<16x32xf32>
      %c0_23 = arith.constant 0 : index
      %c0_24 = arith.constant 0 : index
      %51 = vector.load %arg4[%c0_23, %c0_24] : memref<32x64xf32, #tpu.memory_space<vmem>>, vector<32x64xf32>
      %cst_25 = arith.constant dense<0.000000e+00> : vector<16x64xf32>
      %52 = tpu.matmul %50, %51, %cst_25 {dimension_numbers = #tpu.dot_dimension_numbers<[1], [0], [0], [1], [0, 0, 1, 1], [], []>} : vector<16x32xf32>, vector<32x64xf32>, vector<16x64xf32> -> vector<16x64xf32>
      %c0_26 = arith.constant 0 : index
      %c0_27 = arith.constant 0 : index
      %53 = vector.load %arg5[%c0_26, %c0_27] : memref<1x64xf32, #tpu.memory_space<vmem>>, vector<1x64xf32>
      %54 = vector.broadcast %53 : vector<1x64xf32> to vector<16x64xf32>
      %55 = arith.addf %52, %54 : vector<16x64xf32>
      %c0_28 = arith.constant 0 : index
      %c0_29 = arith.constant 0 : index
      %56 = vector.load %arg12[%c0_28, %c0_29] : memref<16x64xf32, #tpu.memory_space<vmem>>, vector<16x64xf32>
      tpu.vector_store %arg12[%c0_28, %c0_29], %55 {strides = array<i32>} : memref<16x64xf32, #tpu.memory_space<vmem>>, vector<16x64xf32>,
    } else {
    }
    %c1_i32 = arith.constant 1 : i32
    %3 = arith.muli %arg1, %c1_i32 : i32
    %4 = arith.addi %3, %arg2 : i32
    %c16_i32 = arith.constant 16 : i32
    %5 = arith.muli %4, %c16_i32 : i32
    %6 = tpu.assume_multiple %5, 16 : i32
    %c0 = arith.constant 0 : index
    %7 = arith.index_cast %6 : i32 to index
    %c0_1 = arith.constant 0 : index
    %8 = vector.load %arg3[%c0, %7, %c0_1] : memref<1x16x32xf32, #tpu.memory_space<vmem>>, vector<1x16x32xf32>
    %9 = vector.shape_cast %8 : vector<1x16x32xf32> to vector<16x32xf32>
    %c0_2 = arith.constant 0 : index
    %c0_3 = arith.constant 0 : index
    %10 = vector.load %arg6[%c0_2, %c0_3] : memref<32x64xf32, #tpu.memory_space<vmem>>, vector<32x64xf32>
    %cst = arith.constant dense<0.000000e+00> : vector<16x64xf32>
    %11 = tpu.matmul %9, %10, %cst {dimension_numbers = #tpu.dot_dimension_numbers<[1], [0], [0], [1], [0, 0, 1, 1], [], []>} : vector<16x32xf32>, vector<32x64xf32>, vector<16x64xf32> -> vector<16x64xf32>
    %c0_4 = arith.constant 0 : index
    %c0_5 = arith.constant 0 : index
    %12 = vector.load %arg7[%c0_4, %c0_5] : memref<1x64xf32, #tpu.memory_space<vmem>>, vector<1x64xf32>
    %13 = vector.broadcast %12 : vector<1x64xf32> to vector<16x64xf32>
    %14 = arith.addf %11, %13 : vector<16x64xf32>
    %c0_6 = arith.constant 0 : index
    %c0_7 = arith.constant 0 : index
    %15 = vector.load %arg12[%c0_6, %c0_7] : memref<16x64xf32, #tpu.memory_space<vmem>>, vector<16x64xf32>
    %16 = vector.shape_cast %14 : vector<16x64xf32> to vector<16x1x64xf32>
    %17 = vector.shape_cast %15 : vector<16x64xf32> to vector<1x16x64xf32>
    %18 = vector.broadcast %16 : vector<16x1x64xf32> to vector<16x16x64xf32>
    %19 = vector.broadcast %17 : vector<1x16x64xf32> to vector<16x16x64xf32>
    %20 = arith.mulf %18, %19 : vector<16x16x64xf32>
    %21 = vector.shape_cast %20 : vector<16x16x64xf32> to vector<256x64xf32>
    %c0_8 = arith.constant 0 : index
    %c0_9 = arith.constant 0 : index
    %22 = vector.load %arg8[%c0_8, %c0_9] : memref<64x32xf32, #tpu.memory_space<vmem>>, vector<64x32xf32>
    %cst_10 = arith.constant dense<0.000000e+00> : vector<256x32xf32>
    %23 = tpu.matmul %21, %22, %cst_10 {dimension_numbers = #tpu.dot_dimension_numbers<[1], [0], [0], [1], [0, 0, 1, 1], [], []>} : vector<256x64xf32>, vector<64x32xf32>, vector<256x32xf32> -> vector<256x32xf32>
    %24 = tpu.iota {dimensions = array<i32: 0>} : vector<16x16x32xi32>
    %25 = tpu.iota {dimensions = array<i32: 1>} : vector<16x16x32xi32>
    %26 = tpu.iota {dimensions = array<i32: 2>} : vector<16x16x32xi32>
    %27 = vector.broadcast %6 : i32 to vector<16x16x32xi32>
    %28 = arith.addi %27, %24 : vector<16x16x32xi32>
    %29 = arith.subi %28, %25 : vector<16x16x32xi32>
    %c-8_i32 = arith.constant -8 : i32
    %c8_i32 = arith.constant 8 : i32
    %30 = vector.broadcast %c-8_i32 : i32 to vector<16x16x32xi32>
    %31 = arith.maxsi %30, %29 : vector<16x16x32xi32>
    %32 = vector.broadcast %c8_i32 : i32 to vector<16x16x32xi32>
    %33 = arith.minsi %32, %31 : vector<16x16x32xi32>
    %c8_i32_11 = arith.constant 8 : i32
    %34 = vector.broadcast %c8_i32_11 : i32 to vector<16x16x32xi32>
    %35 = arith.addi %33, %34 : vector<16x16x32xi32>
    %36 = arith.cmpi eq, %35, %26 : vector<16x16x32xi32>
    %37 = arith.extui %36 : vector<16x16x32xi1> to vector<16x16x32xi32>
    %38 = arith.sitofp %37 : vector<16x16x32xi32> to vector<16x16x32xf32>
    %39 = vector.shape_cast %38 : vector<16x16x32xf32> to vector<256x32xf32>
    %c0_12 = arith.constant 0 : index
    %c0_13 = arith.constant 0 : index
    %40 = vector.load %arg9[%c0_12, %c0_13] : memref<32x32xf32, #tpu.memory_space<vmem>>, vector<32x32xf32>
    %cst_14 = arith.constant dense<0.000000e+00> : vector<256x32xf32>
    %41 = tpu.matmul %39, %40, %cst_14 {dimension_numbers = #tpu.dot_dimension_numbers<[1], [0], [0], [1], [0, 0, 1, 1], [], []>} : vector<256x32xf32>, vector<32x32xf32>, vector<256x32xf32> -> vector<256x32xf32>
    %42 = arith.addf %23, %41 : vector<256x32xf32>
    %c0_15 = arith.constant 0 : index
    %c0_16 = arith.constant 0 : index
    %43 = vector.load %arg10[%c0_15, %c0_16] : memref<1x32xf32, #tpu.memory_space<vmem>>, vector<1x32xf32>
    %44 = vector.broadcast %43 : vector<1x32xf32> to vector<256x32xf32>
    %45 = arith.addf %42, %44 : vector<256x32xf32>
    %c0_17 = arith.constant 0 : index
    %c0_18 = arith.constant 0 : index
    %c0_19 = arith.constant 0 : index
    %46 = vector.load %arg11[%c0_17, %c0_18, %c0_19] : memref<1x256x32xf32, #tpu.memory_space<vmem>>, vector<1x256x32xf32>
    %47 = vector.shape_cast %46 : vector<1x256x32xf32> to vector<256x32xf32>
    %48 = vector.shape_cast %45 : vector<256x32xf32> to vector<1x256x32xf32>
    tpu.vector_store %arg11[%c0_17, %c0_18, %c0_19], %48 {strides = array<i32>} : memref<1x256x32xf32, #tpu.memory_space<vmem>>, vector<1x256x32xf32>,
    return
  }
  func.func @transform_0(%arg0: i32, %arg1: i32, %arg2: i32) -> (i32, i32, i32) {
    %c0_i32 = arith.constant 0 : i32
    %c0_i32_0 = arith.constant 0 : i32
    %c0_i32_1 = arith.constant 0 : i32
    return %arg0, %c0_i32, %c0_i32_0 : i32, i32, i32
  }
  func.func @transform_1(%arg0: i32, %arg1: i32, %arg2: i32) -> (i32, i32) {
    %c0_i32 = arith.constant 0 : i32
    %c0_i32_0 = arith.constant 0 : i32
    %c0_i32_1 = arith.constant 0 : i32
    return %c0_i32, %c0_i32_0 : i32, i32
  }
  func.func @transform_2(%arg0: i32, %arg1: i32, %arg2: i32) -> (i32, i32) {
    %c0_i32 = arith.constant 0 : i32
    %c0_i32_0 = arith.constant 0 : i32
    %c0_i32_1 = arith.constant 0 : i32
    return %c0_i32, %c0_i32_0 : i32, i32
  }
  func.func @transform_3(%arg0: i32, %arg1: i32, %arg2: i32) -> (i32, i32) {
    %c0_i32 = arith.constant 0 : i32
    %c0_i32_0 = arith.constant 0 : i32
    %c0_i32_1 = arith.constant 0 : i32
    return %c0_i32, %c0_i32_0 : i32, i32
  }
  func.func @transform_4(%arg0: i32, %arg1: i32, %arg2: i32) -> (i32, i32) {
    %c0_i32 = arith.constant 0 : i32
    %c0_i32_0 = arith.constant 0 : i32
    %c0_i32_1 = arith.constant 0 : i32
    return %c0_i32, %c0_i32_0 : i32, i32
  }
  func.func @transform_5(%arg0: i32, %arg1: i32, %arg2: i32) -> (i32, i32) {
    %c0_i32 = arith.constant 0 : i32
    %c0_i32_0 = arith.constant 0 : i32
    %c0_i32_1 = arith.constant 0 : i32
    return %c0_i32, %c0_i32_0 : i32, i32
  }
  func.func @transform_6(%arg0: i32, %arg1: i32, %arg2: i32) -> (i32, i32) {
    %c0_i32 = arith.constant 0 : i32
    %c0_i32_0 = arith.constant 0 : i32
    %c0_i32_1 = arith.constant 0 : i32
    return %c0_i32, %c0_i32_0 : i32, i32
  }
  func.func @transform_7(%arg0: i32, %arg1: i32, %arg2: i32) -> (i32, i32) {
    %c0_i32 = arith.constant 0 : i32
    %c0_i32_0 = arith.constant 0 : i32
    %c0_i32_1 = arith.constant 0 : i32
    return %c0_i32, %c0_i32_0 : i32, i32
  }
  func.func @transform_8(%arg0: i32, %arg1: i32, %arg2: i32) -> (i32, i32, i32) {
    %c1_i32 = arith.constant 1 : i32
    %0 = arith.muli %arg1, %c1_i32 : i32
    %1 = arith.addi %0, %arg2 : i32
    %c0_i32 = arith.constant 0 : i32
    %c0_i32_0 = arith.constant 0 : i32
    return %arg0, %1, %c0_i32 : i32, i32, i32
  }
}

</mosaic_0001>

<llo_original>
// kernel: tpu_custom_call.1
$region0: #{tpu_custom_call.1}
  #allocation0 [shape = 'u32[]', space=smem, size = 0x4, offset = 0x4, fixed_abs, tag = 'smem constant byte address 0x4 - core index']
  #allocation1 [shape = 'u32[144,128]{1,0:T(1,128)}', space=vmem, size = 0x12000, scoped, tag = 'internal scratch']
  #allocation2 [shape = 'f32[16,64]{1,0:T(8,128)}', space=vmem, size = 0x2000, scoped, tag = 'scratch operand']
  %s0 = inlined_call_operand.vmem [shape: f32[2,16,32], index: 0, kind: input, shape index: {}]
  %s1 = inlined_call_operand.vmem [shape: f32[32,64], index: 1, kind: input, shape index: {}]
  %s2 = inlined_call_operand.vmem [shape: f32[1,64], index: 2, kind: input, shape index: {}]
  %s3 = inlined_call_operand.vmem [shape: f32[32,64], index: 3, kind: input, shape index: {}]
  %s4 = inlined_call_operand.vmem [shape: f32[1,64], index: 4, kind: input, shape index: {}]
  %s5 = inlined_call_operand.vmem [shape: f32[64,32], index: 5, kind: input, shape index: {}]
  %s6 = inlined_call_operand.hbm [shape: f32[32,32], index: 6, kind: input, shape index: {}]
  %s7 = inlined_call_operand.vmem [shape: f32[1,32], index: 7, kind: input, shape index: {}]
  %s8 = inlined_call_operand.vmem [shape: f32[2,256,32], index: 8, kind: output, shape index: {}]
  %s9 = sld [smem:[#allocation0]]
  $region73: #{tpu_custom_call.1} parent=0
    _
  %s11 = ssub.s32 1, %s9
  %s12 = scalar_select 0, %s11, %s9
  $region1: #{tpu_custom_call.1} parent=0
    #allocation3 [shape = 'u8[16384]{0}', space=vmem, size = 0x4000, scoped, tag = 'input window, operand 6, single buffered']
    #allocation4 [shape = 's32[2]{0}', space=sflag, size = 0x8, scoped, tag = 'scoped memory for tpu_custom_call.1']
    %13 = vsyncpa [#allocation4], 0
    loop: start=0, step=1, limit=4
    $region2: #{tpu_custom_call.1} parent=1 // loop_pre_header
      _
    $region3: #{tpu_custom_call.1} parent=1 // loop_header
      %s15 = sphi 0, %s19
      %p16 = scmp.ge.s32.totalorder %s15, 4
      %s22 = sphi 0, %s41
      %s23 = sphi 0, %s37
      %s24 = sphi 0, %s33
      %s25 = sphi 0, %s22
      %s26 = sphi 0, %s23
      %s27 = sphi 0, %s24
      %s28 = sphi 0, %s25
      %s29 = sphi 0, %s26
      %s30 = sphi 0, %s27
      %s44 = sphi 0, %s46
      %s47 = sphi 0, %s44
      %s48 = sphi 0, %s47
      %s64 = sphi 0, %s48
      %s68 = sphi 0, %s68
      %s70 = sphi 0, %s68
      %s71 = sphi 0, %s70
      %s85 = sphi 0, %s71
      %s89 = sphi 0, %s89
      %s91 = sphi 0, %s89
      %s92 = sphi 0, %s91
      %s106 = sphi 0, %s92
      %s110 = sphi 0, %s110
      %s112 = sphi 0, %s110
      %s113 = sphi 0, %s112
      %s127 = sphi 0, %s113
      %s131 = sphi 0, %s131
      %s133 = sphi 0, %s131
      %s134 = sphi 0, %s133
      %s148 = sphi 0, %s134
      %s152 = sphi 0, %s152
      %s154 = sphi 0, %s152
      %s155 = sphi 0, %s154
      %s169 = sphi 0, %s155
      %s173 = sphi 0, %s173
      %s175 = sphi 0, %s173
      %s176 = sphi 0, %s175
      %s190 = sphi 0, %s176
      %s194 = sphi 0, %s194
      %s196 = sphi 0, %s194
      %s197 = sphi 0, %s196
      %s211 = sphi 0, %s197
      %s221 = sphi 0, %s223
      %s224 = sphi 0, %s221
      %s225 = sphi 0, %s224
      %s241 = sphi 0, %s225
    $region4: #{tpu_custom_call.1} parent=1 // loop_header_branch
      %18 = sbr.rel (%p16) target = $region8
    $region5: #{tpu_custom_call.1} parent=1 // loop_body
      %s20 = ssub.s32 %s15, 1
      %s21 = ssub.s32 %s15, 2
      %s31 = sadd.s32 1, %s24
      %p32 = scmp.ge.s32.totalorder %s31, 1
      %s33 = scalar_select %p32, 0, %s31
      %s34 = sadd.s32 1, %s23
      %s35 = scalar_select %p32, %s34, %s23
      %p36 = scmp.ge.s32.totalorder %s35, 1
      %s37 = scalar_select %p36, 0, %s35
      %s38 = sadd.s32 1, %s22
      %s39 = scalar_select %p36, %s38, %s22
      %p40 = scmp.ge.s32.totalorder %s39, 2
      %s41 = scalar_select %p40, 0, %s39
      %s42 = ssub.s32 %s22, %s41
      %p43 = scmp.eq.s32.totalorder %s42, 0
      %s45 = sadd.s32 %s44, 1
      %s46 = scalar_select %p43, %s44, %s45
      %p49 = pneg %p43
      %p50 = scmp.eq.s32.totalorder %s15, 1
      %p51 = por %p49, %p50
      %p52 = scmp.ne.s32.totalorder %s44, %s47
      %p53 = scmp.eq.s32.totalorder %s15, 0
      %p54 = por %p52, %p53
      %p55 = scmp.ne.s32.totalorder %s44, %s47
      %p56 = scmp.eq.s32.totalorder %s20, 1
      %p57 = por %p55, %p56
      %p58 = scmp.ne.s32.totalorder %s47, %s48
      %p59 = scmp.eq.s32.totalorder %s20, 0
      %p60 = por %p58, %p59
      %p61 = scmp.ne.s32.totalorder %s47, %s48
      %p62 = scmp.eq.s32.totalorder %s21, 1
      %p63 = por %p61, %p62
      %p65 = scmp.ne.s32.totalorder %s48, %s64
      %p66 = scmp.eq.s32.totalorder %s21, 0
      %p67 = por %p65, %p66
      %s69 = sadd.s32 %s68, 1
      %p72 = scmp.eq.s32.totalorder %s15, 1
      %p73 = scmp.ne.s32.totalorder %s68, %s70
      %p74 = scmp.eq.s32.totalorder %s15, 0
      %p75 = por %p73, %p74
      %p76 = scmp.ne.s32.totalorder %s68, %s70
      %p77 = scmp.eq.s32.totalorder %s20, 1
      %p78 = por %p76, %p77
      %p79 = scmp.ne.s32.totalorder %s70, %s71
      %p80 = scmp.eq.s32.totalorder %s20, 0
      %p81 = por %p79, %p80
      %p82 = scmp.ne.s32.totalorder %s70, %s71
      %p83 = scmp.eq.s32.totalorder %s21, 1
      %p84 = por %p82, %p83
      %p86 = scmp.ne.s32.totalorder %s71, %s85
      %p87 = scmp.eq.s32.totalorder %s21, 0
      %p88 = por %p86, %p87
      %s90 = sadd.s32 %s89, 1
      %p93 = scmp.eq.s32.totalorder %s15, 1
      %p94 = scmp.ne.s32.totalorder %s89, %s91
      %p95 = scmp.eq.s32.totalorder %s15, 0
      %p96 = por %p94, %p95
      %p97 = scmp.ne.s32.totalorder %s89, %s91
      %p98 = scmp.eq.s32.totalorder %s20, 1
      %p99 = por %p97, %p98
      %p100 = scmp.ne.s32.totalorder %s91, %s92
      %p101 = scmp.eq.s32.totalorder %s20, 0
      %p102 = por %p100, %p101
      %p103 = scmp.ne.s32.totalorder %s91, %s92
      %p104 = scmp.eq.s32.totalorder %s21, 1
      %p105 = por %p103, %p104
      %p107 = scmp.ne.s32.totalorder %s92, %s106
      %p108 = scmp.eq.s32.totalorder %s21, 0
      %p109 = por %p107, %p108
      %s111 = sadd.s32 %s110, 1
      %p114 = scmp.eq.s32.totalorder %s15, 1
      %p115 = scmp.ne.s32.totalorder %s110, %s112
      %p116 = scmp.eq.s32.totalorder %s15, 0
      %p117 = por %p115, %p116
      %p118 = scmp.ne.s32.totalorder %s110, %s112
      %p119 = scmp.eq.s32.totalorder %s20, 1
      %p120 = por %p118, %p119
      %p121 = scmp.ne.s32.totalorder %s112, %s113
      %p122 = scmp.eq.s32.totalorder %s20, 0
      %p123 = por %p121, %p122
      %p124 = scmp.ne.s32.totalorder %s112, %s113
      %p125 = scmp.eq.s32.totalorder %s21, 1
      %p126 = por %p124, %p125
      %p128 = scmp.ne.s32.totalorder %s113, %s127
      %p129 = scmp.eq.s32.totalorder %s21, 0
      %p130 = por %p128, %p129
      %s132 = sadd.s32 %s131, 1
      %p135 = scmp.eq.s32.totalorder %s15, 1
      %p136 = scmp.ne.s32.totalorder %s131, %s133
      %p137 = scmp.eq.s32.totalorder %s15, 0
      %p138 = por %p136, %p137
      %p139 = scmp.ne.s32.totalorder %s131, %s133
      %p140 = scmp.eq.s32.totalorder %s20, 1
      %p141 = por %p139, %p140
      %p142 = scmp.ne.s32.totalorder %s133, %s134
      %p143 = scmp.eq.s32.totalorder %s20, 0
      %p144 = por %p142, %p143
      %p145 = scmp.ne.s32.totalorder %s133, %s134
      %p146 = scmp.eq.s32.totalorder %s21, 1
      %p147 = por %p145, %p146
      %p149 = scmp.ne.s32.totalorder %s134, %s148
      %p150 = scmp.eq.s32.totalorder %s21, 0
      %p151 = por %p149, %p150
      %s153 = sadd.s32 %s152, 1
      %p156 = scmp.eq.s32.totalorder %s15, 1
      %p157 = scmp.ne.s32.totalorder %s152, %s154
      %p158 = scmp.eq.s32.totalorder %s15, 0
      %p159 = por %p157, %p158
      %p160 = scmp.ne.s32.totalorder %s152, %s154
      %p161 = scmp.eq.s32.totalorder %s20, 1
      %p162 = por %p160, %p161
      %p163 = scmp.ne.s32.totalorder %s154, %s155
      %p164 = scmp.eq.s32.totalorder %s20, 0
      %p165 = por %p163, %p164
      %p166 = scmp.ne.s32.totalorder %s154, %s155
      %p167 = scmp.eq.s32.totalorder %s21, 1
      %p168 = por %p166, %p167
      %p170 = scmp.ne.s32.totalorder %s155, %s169
      %p171 = scmp.eq.s32.totalorder %s21, 0
      %p172 = por %p170, %p171
      %s174 = sadd.s32 %s173, 1
      %p177 = scmp.eq.s32.totalorder %s15, 1
      %p178 = scmp.ne.s32.totalorder %s173, %s175
      %p179 = scmp.eq.s32.totalorder %s15, 0
      %p180 = por %p178, %p179
      %p181 = scmp.ne.s32.totalorder %s173, %s175
      %p182 = scmp.eq.s32.totalorder %s20, 1
      %p183 = por %p181, %p182
      %p184 = scmp.ne.s32.totalorder %s175, %s176
      %p185 = scmp.eq.s32.totalorder %s20, 0
      %p186 = por %p184, %p185
      %p187 = scmp.ne.s32.totalorder %s175, %s176
      %p188 = scmp.eq.s32.totalorder %s21, 1
      %p189 = por %p187, %p188
      %p191 = scmp.ne.s32.totalorder %s176, %s190
      %p192 = scmp.eq.s32.totalorder %s21, 0
      %p193 = por %p191, %p192
      %s195 = sadd.s32 %s194, 1
      %p198 = scmp.eq.s32.totalorder %s15, 1
      %p199 = scmp.ne.s32.totalorder %s194, %s196
      %p200 = scmp.eq.s32.totalorder %s15, 0
      %p201 = por %p199, %p200
      %p202 = scmp.ne.s32.totalorder %s194, %s196
      %p203 = scmp.eq.s32.totalorder %s20, 1
      %p204 = por %p202, %p203
      %p205 = scmp.ne.s32.totalorder %s196, %s197
      %p206 = scmp.eq.s32.totalorder %s20, 0
      %p207 = por %p205, %p206
      %p208 = scmp.ne.s32.totalorder %s196, %s197
      %p209 = scmp.eq.s32.totalorder %s21, 1
      %p210 = por %p208, %p209
      %p212 = scmp.ne.s32.totalorder %s197, %s211
      %p213 = scmp.eq.s32.totalorder %s21, 0
      %p214 = por %p212, %p213
      %s215 = sadd.s32 %s23, %s24
      %s216 = sadd.s32 %s37, %s33
      %s217 = ssub.s32 %s22, %s41
      %s218 = ssub.s32 %s215, %s216
      %s219 = sor.u32 %s217, %s218
      %p220 = scmp.eq.s32.totalorder %s219, 0
      %s222 = sadd.s32 %s221, 1
      %s223 = scalar_select %p220, %s221, %s222
      %p226 = pneg %p220
      %p227 = scmp.eq.s32.totalorder %s15, 1
      %p228 = por %p226, %p227
      %p229 = scmp.ne.s32.totalorder %s221, %s224
      %p230 = scmp.eq.s32.totalorder %s15, 0
      %p231 = por %p229, %p230
      %p232 = scmp.ne.s32.totalorder %s221, %s224
      %p233 = scmp.eq.s32.totalorder %s20, 1
      %p234 = por %p232, %p233
      %p235 = scmp.ne.s32.totalorder %s224, %s225
      %p236 = scmp.eq.s32.totalorder %s20, 0
      %p237 = por %p235, %p236
      %p238 = scmp.ne.s32.totalorder %s224, %s225
      %p239 = scmp.eq.s32.totalorder %s21, 1
      %p240 = por %p238, %p239
      %p242 = scmp.ne.s32.totalorder %s225, %s241
      %p243 = scmp.eq.s32.totalorder %s21, 0
      %p244 = por %p242, %p243
      %p245 = scmp.le.s32.totalorder 1, %s15
      %p246 = scmp.lt.s32.totalorder %s15, 3
      %p247 = pnand %p245, %p246
      %p248 = pneg %p247
      // Predicated region
      $region9: #{tpu_custom_call.1} parent=5 // pred_check
        _
      $region10: #{tpu_custom_call.1} parent=5 // pred_check_branch
        %250 = sbr.rel (%p247) target = $region12
      $region11: #{tpu_custom_call.1} parent=5 // pred_region
        %s251 = ssub.s32 %s15, 1
        // Predicated region
        $region13: #{tpu_custom_call.1} parent=11 // pred_check
          %p252 = pneg %p81
        $region14: #{tpu_custom_call.1} parent=11 // pred_check_branch
          %254 = sbr.rel (%p252) target = $region16
        $region15: #{tpu_custom_call.1} parent=11 // pred_region
          _
        $region16: #{tpu_custom_call.1} parent=11 // pred_fallthru
          _
        // Predicated region
        $region17: #{tpu_custom_call.1} parent=11 // pred_check
          %p255 = pneg %p102
        $region18: #{tpu_custom_call.1} parent=11 // pred_check_branch
          %257 = sbr.rel (%p255) target = $region20
        $region19: #{tpu_custom_call.1} parent=11 // pred_region
          _
        $region20: #{tpu_custom_call.1} parent=11 // pred_fallthru
          _
        // Predicated region
        $region21: #{tpu_custom_call.1} parent=11 // pred_check
          %p258 = pneg %p123
        $region22: #{tpu_custom_call.1} parent=11 // pred_check_branch
          %260 = sbr.rel (%p258) target = $region24
        $region23: #{tpu_custom_call.1} parent=11 // pred_region
          _
        $region24: #{tpu_custom_call.1} parent=11 // pred_fallthru
          _
        // Predicated region
        $region25: #{tpu_custom_call.1} parent=11 // pred_check
          %p261 = pneg %p144
        $region26: #{tpu_custom_call.1} parent=11 // pred_check_branch
          %263 = sbr.rel (%p261) target = $region28
        $region27: #{tpu_custom_call.1} parent=11 // pred_region
          _
        $region28: #{tpu_custom_call.1} parent=11 // pred_fallthru
          _
        // Predicated region
        $region29: #{tpu_custom_call.1} parent=11 // pred_check
          %p264 = pneg %p165
        $region30: #{tpu_custom_call.1} parent=11 // pred_check_branch
          %266 = sbr.rel (%p264) target = $region32
        $region31: #{tpu_custom_call.1} parent=11 // pred_region
          _
        $region32: #{tpu_custom_call.1} parent=11 // pred_fallthru
          _
        // Predicated region
        $region33: #{tpu_custom_call.1} parent=11 // pred_check
          %p267 = pneg %p186
        $region34: #{tpu_custom_call.1} parent=11 // pred_check_branch
          %269 = sbr.rel (%p267) target = $region36
        $region35: #{tpu_custom_call.1} parent=11 // pred_region
          %s271 = ssub.s32 512, 512
          %272 = vsyncadd [#allocation4], %s271
          %s273 = sshll.u32 [#allocation3], 4
          %s274 = int_to_ptr.vmem [resolvable:$true] %s273
          %279 = dma.hbm_to_vmem [thread:$0]  %s6, 512, %s274, [#allocation4], 128, 128, 8
        $region36: #{tpu_custom_call.1} parent=11 // pred_fallthru
          _
        // Predicated region
        $region37: #{tpu_custom_call.1} parent=11 // pred_check
          %p280 = pneg %p207
        $region38: #{tpu_custom_call.1} parent=11 // pred_check_branch
          %282 = sbr.rel (%p280) target = $region40
        $region39: #{tpu_custom_call.1} parent=11 // pred_region
          _
        $region40: #{tpu_custom_call.1} parent=11 // pred_fallthru
          _
      $region12: #{tpu_custom_call.1} parent=5 // pred_fallthru
        _
      %p283 = scmp.lt.s32.totalorder %s15, 2
      // Predicated region
      $region41: #{tpu_custom_call.1} parent=5 // pred_check
        %p284 = pneg %p283
      $region42: #{tpu_custom_call.1} parent=5 // pred_check_branch
        %286 = sbr.rel (%p284) target = $region44
      $region43: #{tpu_custom_call.1} parent=5 // pred_region
        // Predicated region
        $region45: #{tpu_custom_call.1} parent=43 // pred_check
          %p287 = pneg %p54
        $region46: #{tpu_custom_call.1} parent=43 // pred_check_branch
          %289 = sbr.rel (%p287) target = $region48
        $region47: #{tpu_custom_call.1} parent=43 // pred_region
          %p290 = scmp.lt.s32.totalorder %s22, 1
          %s291 = scalar_select %p290, %s22, 1
          %s292 = smul.addr %s291, 2
          %s293 = smul.addr %s292, 8
          %s294 = scalar_lea.vmem %s0, %s293
        $region48: #{tpu_custom_call.1} parent=43 // pred_fallthru
          _
      $region44: #{tpu_custom_call.1} parent=5 // pred_fallthru
        _
      %p295 = scmp.le.s32.totalorder 1, %s15
      %p296 = scmp.lt.s32.totalorder %s15, 3
      %p297 = pnand %p295, %p296
      %p298 = pneg %p297
      // Predicated region
      $region49: #{tpu_custom_call.1} parent=5 // pred_check
        _
      $region50: #{tpu_custom_call.1} parent=5 // pred_check_branch
        %300 = sbr.rel (%p297) target = $region52
      $region51: #{tpu_custom_call.1} parent=5 // pred_region
        %s301 = ssub.s32 %s15, 1
        // Predicated region
        $region53: #{tpu_custom_call.1} parent=51 // pred_check
          %p302 = pneg %p186
        $region54: #{tpu_custom_call.1} parent=51 // pred_check_branch
          %304 = sbr.rel (%p302) target = $region56
        $region55: #{tpu_custom_call.1} parent=51 // pred_region
          %305 = dma.done [#allocation4], 512
        $region56: #{tpu_custom_call.1} parent=51 // pred_fallthru
          _
        %p306 = scmp.lt.s32.totalorder %s25, 1
        %s307 = scalar_select %p306, %s25, 1
        %s308 = smul.addr %s307, 2
        %s309 = smul.addr %s308, 8
        %s310 = scalar_lea.vmem %s0, %s309
        %p311 = pneg %p60
        %p312 = pneg %p57
        %p313 = pneg %p81
        %p314 = pneg %p78
        %p315 = pneg %p102
        %p316 = pneg %p99
        %p317 = pneg %p123
        %p318 = pneg %p120
        %p319 = pneg %p144
        %p320 = pneg %p141
        %p321 = pneg %p165
        %p322 = pneg %p162
        %p323 = pneg %p186
        %p324 = pneg %p183
        %p325 = pneg %p207
        %p326 = pneg %p204
        %p327 = pneg %p237
        %p328 = pneg %p234
        %s329 = sadd.s32 %s26, %s27
        %s330 = smul.u32 32, %s329
        %p331 = scmp.lt.s32.totalorder %s25, 1
        %s332 = scalar_select %p331, %s25, 1
        %p333 = scmp.lt.s32.totalorder %s330, 31
        %s334 = scalar_select %p333, %s330, 31
        %s335 = smul.addr %s332, 32
        %s336 = sadd.s32 %s334, %s335
        %s337 = smul.addr %s336, 8
        %s338 = scalar_lea.vmem %s8, %s337
        %p339 = scmp.lt.s32.totalorder %s25, 1
        %s340 = scalar_select %p339, %s25, 1
        %s341 = smul.addr %s340, 2
        %s342 = smul.addr %s341, 8
        %s343 = scalar_lea.vmem %s0, %s342
        %s344 = sadd.s32 %s26, %s27
        %s345 = smul.u32 32, %s344
        %p346 = scmp.lt.s32.totalorder %s25, 1
        %s347 = scalar_select %p346, %s25, 1
        %p348 = scmp.lt.s32.totalorder %s345, 31
        %s349 = scalar_select %p348, %s345, 31
        %s350 = smul.addr %s347, 32
        %s351 = sadd.s32 %s349, %s350
        %s352 = smul.addr %s351, 8
        %s353 = scalar_lea.vmem %s8, %s352
        %s354 = sadd.s32 %s26, %s27
        %s355 = smul.u32 32, %s354
        %p356 = scmp.eq.s32.totalorder %s27, 0
        // Predicated region
        $region57: #{tpu_custom_call.1} parent=51 // pred_check
          %p357 = pneg %p356
        $region58: #{tpu_custom_call.1} parent=51 // pred_check_branch
          %359 = sbr.rel (%p357) target = $region60
        $region59: #{tpu_custom_call.1} parent=51 // pred_region
          %v360 = vld [vmem:[%s343] sm:$0xff]
          %v361 = vld [vmem:[%s343 + $0x8] sm:$0xff]
          %v362 = vld [vmem:[%s1] sm:$0xff]
          %v363 = vld [vmem:[%s1 + $0x8] sm:$0xff]
          %v364 = vld [vmem:[%s1 + $0x10] sm:$0xff]
          %v365 = vld [vmem:[%s1 + $0x18] sm:$0xff]
          %v366 = vld [vmem:[%s2] sm:$0x1]
          %v368 = vlaneseq
          %v369 = vshrl.u32 %v368, 7
          %v370 = vsub.s32 0, %v369
          %v371 = vrot.slane %v366, %v370
          %vm373 = vcmask 261120
          %v375 = vsel %vm373, %v360, 0
          %v378 = vsel %vm373, %v361, 0
          %380 = vmatprep.subr.mxu0 0.0
          %381 = vmatpush1.msra.mxu0 0.0
          %382 = vmatprep.subr.mxu0 0.0
          %383 = vmatpush1.msra.mxu0 0.0
          %384 = vmatprep.subr.mxu0 0.0
          %385 = vmatpush1.msra.mxu0 0.0
          %386 = vmatprep.subr.mxu0 0.0
          %387 = vmatpush1.msra.mxu0 0.0
          %388 = vmatprep.subr.mxu0 0.0
          %389 = vmatpush1.msra.mxu0 0.0
          %390 = vmatprep.subr.mxu0 0.0
          %391 = vmatpush1.msra.mxu0 0.0
          %392 = vmatprep.subr.mxu0 0.0
          %393 = vmatpush1.msra.mxu0 0.0
          %394 = vmatprep.subr.mxu0 0.0
          %395 = vmatpush1.msra.mxu0 0.0
          %396 = vmatprep.subr.mxu0 0.0
          %397 = vmatpush1.msra.mxu0 0.0
          %398 = vmatprep.subr.mxu0 0.0
          %399 = vmatpush1.msra.mxu0 0.0
          %400 = vmatprep.subr.mxu0 0.0
          %401 = vmatpush1.msra.mxu0 0.0
          %402 = vmatprep.subr.mxu0 0.0
          %403 = vmatpush1.msra.mxu0 0.0
          %404 = vmatprep.subr.mxu0 0.0
          %405 = vmatpush1.msra.mxu0 %v365
          %406 = vmatprep.subr.mxu0 0.0
          %407 = vmatpush1.msra.mxu0 %v364
          %408 = vmatprep.subr.mxu0 0.0
          %409 = vmatpush1.msra.mxu0 %v363
          %410 = vmatprep.subr.mxu0 0.0
          %411 = vmatpush1.msra.mxu0 %v362
          %412 = vmatprep.subr.mxu0 0.0
          %413 = vmatpush2.msra.mxu0 0.0
          %414 = vmatprep.subr.mxu0 0.0
          %415 = vmatpush2.msra.mxu0 0.0
          %416 = vmatprep.subr.mxu0 0.0
          %417 = vmatpush2.msra.mxu0 0.0
          %418 = vmatprep.subr.mxu0 0.0
          %419 = vmatpush2.msra.mxu0 0.0
          %420 = vmatprep.subr.mxu0 0.0
          %421 = vmatpush2.msra.mxu0 0.0
          %422 = vmatprep.subr.mxu0 0.0
          %423 = vmatpush2.msra.mxu0 0.0
          %424 = vmatprep.subr.mxu0 0.0
          %425 = vmatpush2.msra.mxu0 0.0
          %426 = vmatprep.subr.mxu0 0.0
          %427 = vmatpush2.msra.mxu0 0.0
          %428 = vmatprep.subr.mxu0 0.0
          %429 = vmatpush2.msra.mxu0 0.0
          %430 = vmatprep.subr.mxu0 0.0
          %431 = vmatpush2.msra.mxu0 0.0
          %432 = vmatprep.subr.mxu0 0.0
          %433 = vmatpush2.msra.mxu0 0.0
          %434 = vmatprep.subr.mxu0 0.0
          %435 = vmatpush2.msra.mxu0 0.0
          %436 = vmatprep.subr.mxu0 0.0
          %437 = vmatpush2.msra.mxu0 0.0
          %438 = vmatprep.subr.mxu0 0.0
          %439 = vmatpush2.msra.mxu0 0.0
          %440 = vmatprep.subr.mxu0 0.0
          %441 = vmatpush2.msra.mxu0 0.0
          %442 = vmatprep.subr.mxu0 0.0
          %443 = vmatpush2.msra.mxu0 0.0
          %444 = vmatprep.mubr.f32.mxu0 0.0
          %445 = vmatmul.mubr.f32.gmra.mxu0 %v375
          %v446 = vpop.f32.mrf.mxu0
          %v447 = vadd.f32 %v371, %v446
          %v448 = vpop.f32.mrf.mxu0
          %449 = vmatprep.mubr.f32.mxu0 0.0
          %450 = vmatmul.mubr.f32.gmra.mxu0 %v378
          %v451 = vpop.f32.mrf.mxu0
          %v452 = vadd.f32 %v371, %v451
          %v453 = vpop.f32.mrf.mxu0
          %454 = vdwg.mxu0
          %vm455 = vcmask 523264
          %456 = vst.msk [vmem:[#allocation2] sm:$0xff] %vm455, %v447
          %457 = vst.msk [vmem:[#allocation2 + $0x8] sm:$0xff] %vm455, %v452
        $region60: #{tpu_custom_call.1} parent=51 // pred_fallthru
          _
        %s458 = sadd.s32 %s26, %s27
        %s459 = smul.u32 %s458, 16
        %s460 = scalar_lea.vmem %s343, %s459
        %v461 = vld [vmem:[%s460] sm:$0xff]
        %v462 = vld [vmem:[%s460 + $0x8] sm:$0xff]
        %v463 = vld [vmem:[%s3] sm:$0xff]
        %v464 = vld [vmem:[%s3 + $0x8] sm:$0xff]
        %v465 = vld [vmem:[%s3 + $0x10] sm:$0xff]
        %v466 = vld [vmem:[%s3 + $0x18] sm:$0xff]
        %v467 = vld [vmem:[%s4] sm:$0x1]
        %v469 = vlaneseq
        %v470 = vshrl.u32 %v469, 7
        %v471 = vsub.s32 0, %v470
        %v472 = vrot.slane %v467, %v471
        %vm474 = vcmask 261120
        %v476 = vsel %vm474, %v461, 0
        %v479 = vsel %vm474, %v462, 0
        %481 = vmatprep.subr.mxu0 0.0
        %482 = vmatpush1.msra.mxu0 0.0
        %483 = vmatprep.subr.mxu0 0.0
        %484 = vmatpush1.msra.mxu0 0.0
        %485 = vmatprep.subr.mxu0 0.0
        %486 = vmatpush1.msra.mxu0 0.0
        %487 = vmatprep.subr.mxu0 0.0
        %488 = vmatpush1.msra.mxu0 0.0
        %489 = vmatprep.subr.mxu0 0.0
        %490 = vmatpush1.msra.mxu0 0.0
        %491 = vmatprep.subr.mxu0 0.0
        %492 = vmatpush1.msra.mxu0 0.0
        %493 = vmatprep.subr.mxu0 0.0
        %494 = vmatpush1.msra.mxu0 0.0
        %495 = vmatprep.subr.mxu0 0.0
        %496 = vmatpush1.msra.mxu0 0.0
        %497 = vmatprep.subr.mxu0 0.0
        %498 = vmatpush1.msra.mxu0 0.0
        %499 = vmatprep.subr.mxu0 0.0
        %500 = vmatpush1.msra.mxu0 0.0
        %501 = vmatprep.subr.mxu0 0.0
        %502 = vmatpush1.msra.mxu0 0.0
        %503 = vmatprep.subr.mxu0 0.0
        %504 = vmatpush1.msra.mxu0 0.0
        %505 = vmatprep.subr.mxu0 0.0
        %506 = vmatpush1.msra.mxu0 %v466
        %507 = vmatprep.subr.mxu0 0.0
        %508 = vmatpush1.msra.mxu0 %v465
        %509 = vmatprep.subr.mxu0 0.0
        %510 = vmatpush1.msra.mxu0 %v464
        %511 = vmatprep.subr.mxu0 0.0
        %512 = vmatpush1.msra.mxu0 %v463
        %513 = vmatprep.subr.mxu0 0.0
        %514 = vmatpush2.msra.mxu0 0.0
        %515 = vmatprep.subr.mxu0 0.0
        %516 = vmatpush2.msra.mxu0 0.0
        %517 = vmatprep.subr.mxu0 0.0
        %518 = vmatpush2.msra.mxu0 0.0
        %519 = vmatprep.subr.mxu0 0.0
        %520 = vmatpush2.msra.mxu0 0.0
        %521 = vmatprep.subr.mxu0 0.0
        %522 = vmatpush2.msra.mxu0 0.0
        %523 = vmatprep.subr.mxu0 0.0
        %524 = vmatpush2.msra.mxu0 0.0
        %525 = vmatprep.subr.mxu0 0.0
        %526 = vmatpush2.msra.mxu0 0.0
        %527 = vmatprep.subr.mxu0 0.0
        %528 = vmatpush2.msra.mxu0 0.0
        %529 = vmatprep.subr.mxu0 0.0
        %530 = vmatpush2.msra.mxu0 0.0
        %531 = vmatprep.subr.mxu0 0.0
        %532 = vmatpush2.msra.mxu0 0.0
        %533 = vmatprep.subr.mxu0 0.0
        %534 = vmatpush2.msra.mxu0 0.0
        %535 = vmatprep.subr.mxu0 0.0
        %536 = vmatpush2.msra.mxu0 0.0
        %537 = vmatprep.subr.mxu0 0.0
        %538 = vmatpush2.msra.mxu0 0.0
        %539 = vmatprep.subr.mxu0 0.0
        %540 = vmatpush2.msra.mxu0 0.0
        %541 = vmatprep.subr.mxu0 0.0
        %542 = vmatpush2.msra.mxu0 0.0
        %543 = vmatprep.subr.mxu0 0.0
        %544 = vmatpush2.msra.mxu0 0.0
        %545 = vmatprep.mubr.f32.mxu0 0.0
        %546 = vmatmul.mubr.f32.gmra.mxu0 %v476
        %v547 = vpop.f32.mrf.mxu0
        %v548 = vadd.f32 %v472, %v547
        %v549 = vpop.f32.mrf.mxu0
        %550 = vmatprep.mubr.f32.mxu0 0.0
        %551 = vmatmul.mubr.f32.gmra.mxu0 %v479
        %v552 = vpop.f32.mrf.mxu0
        %v553 = vadd.f32 %v472, %v552
        %v554 = vpop.f32.mrf.mxu0
        %555 = vdwg.mxu0
        %v556 = vld [vmem:[#allocation2] sm:$0xff]
        %v557 = vld [vmem:[#allocation2 + $0x8] sm:$0xff]
        %v560 = vcombine.high %v548, %v548
        %v562 = vunpack.c.l.s4 1966171168
        %v563 = vunpack.c.0.s8 %v562
        %v564 = vlaneseq
        %v565 = vshrl.u32 %v564, 7
        %v566 = vsub.s32 %v563, %v565
        %v567 = vrot.slane %v548, %v566
        %v569 = vunpack.c.l.s4 1966171168
        %v570 = vunpack.c.0.s8 %v569
        %v571 = vlaneseq
        %v572 = vshrl.u32 %v571, 7
        %v573 = vsub.s32 %v570, %v572
        %v574 = vrot.slane %v560, %v573
        %v575 = vcombine.high %v567, %v567
        %v576 = vcombine.high %v574, %v574
        %v578 = vunpack.c.l.s4 1966171168
        %v579 = vunpack.c.0.s8 %v578
        %v580 = vlaneseq
        %v581 = vshrl.u32 %v580, 7
        %v582 = vsub.s32 %v579, %v581
        %v583 = vrot.slane %v567, %v582
        %v585 = vunpack.c.l.s4 1966171168
        %v586 = vunpack.c.0.s8 %v585
        %v587 = vlaneseq
        %v588 = vshrl.u32 %v587, 7
        %v589 = vsub.s32 %v586, %v588
        %v590 = vrot.slane %v574, %v589
        %v592 = vunpack.c.l.s4 1966171168
        %v593 = vunpack.c.0.s8 %v592
        %v594 = vlaneseq
        %v595 = vshrl.u32 %v594, 7
        %v596 = vsub.s32 %v593, %v595
        %v597 = vrot.slane %v575, %v596
        %v599 = vunpack.c.l.s4 1966171168
        %v600 = vunpack.c.0.s8 %v599
        %v601 = vlaneseq
        %v602 = vshrl.u32 %v601, 7
        %v603 = vsub.s32 %v600, %v602
        %v604 = vrot.slane %v576, %v603
        %v605 = vcombine.high %v583, %v583
        %v606 = vcombine.high %v590, %v590
        %v607 = vcombine.high %v597, %v597
        %v608 = vcombine.high %v604, %v604
        %v609 = vcombine.high %v553, %v553
        %v611 = vunpack.c.l.s4 1966171168
        %v612 = vunpack.c.0.s8 %v611
        %v613 = vlaneseq
        %v614 = vshrl.u32 %v613, 7
        %v615 = vsub.s32 %v612, %v614
        %v616 = vrot.slane %v553, %v615
        %v618 = vunpack.c.l.s4 1966171168
        %v619 = vunpack.c.0.s8 %v618
        %v620 = vlaneseq
        %v621 = vshrl.u32 %v620, 7
        %v622 = vsub.s32 %v619, %v621
        %v623 = vrot.slane %v609, %v622
        %v624 = vcombine.high %v616, %v616
        %v625 = vcombine.high %v623, %v623
        %v627 = vunpack.c.l.s4 1966171168
        %v628 = vunpack.c.0.s8 %v627
        %v629 = vlaneseq
        %v630 = vshrl.u32 %v629, 7
        %v631 = vsub.s32 %v628, %v630
        %v632 = vrot.slane %v616, %v631
        %v634 = vunpack.c.l.s4 1966171168
        %v635 = vunpack.c.0.s8 %v634
        %v636 = vlaneseq
        %v637 = vshrl.u32 %v636, 7
        %v638 = vsub.s32 %v635, %v637
        %v639 = vrot.slane %v623, %v638
        %v641 = vunpack.c.l.s4 1966171168
        %v642 = vunpack.c.0.s8 %v641
        %v643 = vlaneseq
        %v644 = vshrl.u32 %v643, 7
        %v645 = vsub.s32 %v642, %v644
        %v646 = vrot.slane %v624, %v645
        %v648 = vunpack.c.l.s4 1966171168
        %v649 = vunpack.c.0.s8 %v648
        %v650 = vlaneseq
        %v651 = vshrl.u32 %v650, 7
        %v652 = vsub.s32 %v649, %v651
        %v653 = vrot.slane %v625, %v652
        %v654 = vcombine.high %v632, %v632
        %v655 = vcombine.high %v639, %v639
        %v656 = vcombine.high %v646, %v646
        %v657 = vcombine.high %v653, %v653
        %v658 = vlaneseq
        %v659 = vshrl.u32 %v658, 7
        %v660 = vsub.s32 0, %v659
        %v661 = vrot.slane %v583, %v660
        %v662 = vlaneseq
        %v663 = vshrl.u32 %v662, 7
        %v664 = vsub.s32 0, %v663
        %v665 = vrot.slane %v597, %v664
        %v666 = vlaneseq
        %v667 = vshrl.u32 %v666, 7
        %v668 = vsub.s32 0, %v667
        %v669 = vrot.slane %v605, %v668
        %v670 = vlaneseq
        %v671 = vshrl.u32 %v670, 7
        %v672 = vsub.s32 0, %v671
        %v673 = vrot.slane %v607, %v672
        %v674 = vlaneseq
        %v675 = vshrl.u32 %v674, 7
        %v676 = vsub.s32 0, %v675
        %v677 = vrot.slane %v590, %v676
        %v678 = vlaneseq
        %v679 = vshrl.u32 %v678, 7
        %v680 = vsub.s32 0, %v679
        %v681 = vrot.slane %v604, %v680
        %v682 = vlaneseq
        %v683 = vshrl.u32 %v682, 7
        %v684 = vsub.s32 0, %v683
        %v685 = vrot.slane %v606, %v684
        %v686 = vlaneseq
        %v687 = vshrl.u32 %v686, 7
        %v688 = vsub.s32 0, %v687
        %v689 = vrot.slane %v608, %v688
        %v690 = vlaneseq
        %v691 = vshrl.u32 %v690, 7
        %v692 = vsub.s32 0, %v691
        %v693 = vrot.slane %v632, %v692
        %v694 = vlaneseq
        %v695 = vshrl.u32 %v694, 7
        %v696 = vsub.s32 0, %v695
        %v697 = vrot.slane %v646, %v696
        %v698 = vlaneseq
        %v699 = vshrl.u32 %v698, 7
        %v700 = vsub.s32 0, %v699
        %v701 = vrot.slane %v654, %v700
        %v702 = vlaneseq
        %v703 = vshrl.u32 %v702, 7
        %v704 = vsub.s32 0, %v703
        %v705 = vrot.slane %v656, %v704
        %v706 = vlaneseq
        %v707 = vshrl.u32 %v706, 7
        %v708 = vsub.s32 0, %v707
        %v709 = vrot.slane %v639, %v708
        %v710 = vlaneseq
        %v711 = vshrl.u32 %v710, 7
        %v712 = vsub.s32 0, %v711
        %v713 = vrot.slane %v653, %v712
        %v714 = vlaneseq
        %v715 = vshrl.u32 %v714, 7
        %v716 = vsub.s32 0, %v715
        %v717 = vrot.slane %v655, %v716
        %v718 = vlaneseq
        %v719 = vshrl.u32 %v718, 7
        %v720 = vsub.s32 0, %v719
        %v721 = vrot.slane %v657, %v720
        %v738 = vmul.f32 %v661, %v556
        %v739 = vmul.f32 %v661, %v557
        %v740 = vmul.f32 %v665, %v556
        %v741 = vmul.f32 %v665, %v557
        %v742 = vmul.f32 %v669, %v556
        %v743 = vmul.f32 %v669, %v557
        %v744 = vmul.f32 %v673, %v556
        %v745 = vmul.f32 %v673, %v557
        %v746 = vmul.f32 %v677, %v556
        %v747 = vmul.f32 %v677, %v557
        %v748 = vmul.f32 %v681, %v556
        %v749 = vmul.f32 %v681, %v557
        %v750 = vmul.f32 %v685, %v556
        %v751 = vmul.f32 %v685, %v557
        %v752 = vmul.f32 %v689, %v556
        %v753 = vmul.f32 %v689, %v557
        %v754 = vmul.f32 %v693, %v556
        %v755 = vmul.f32 %v693, %v557
        %v756 = vmul.f32 %v697, %v556
        %v757 = vmul.f32 %v697, %v557
        %v758 = vmul.f32 %v701, %v556
        %v759 = vmul.f32 %v701, %v557
        %v760 = vmul.f32 %v705, %v556
        %v761 = vmul.f32 %v705, %v557
        %v762 = vmul.f32 %v709, %v556
        %v763 = vmul.f32 %v709, %v557
        %v764 = vmul.f32 %v713, %v556
        %v765 = vmul.f32 %v713, %v557
        %v766 = vmul.f32 %v717, %v556
        %v767 = vmul.f32 %v717, %v557
        %v768 = vmul.f32 %v721, %v556
        %v769 = vmul.f32 %v721, %v557
        %v770 = vld [vmem:[%s5] sm:$0xff]
        %v771 = vld [vmem:[%s5 + $0x8] sm:$0xff]
        %v772 = vld [vmem:[%s5 + $0x10] sm:$0xff]
        %v773 = vld [vmem:[%s5 + $0x18] sm:$0xff]
        %v774 = vld [vmem:[%s5 + $0x20] sm:$0xff]
        %v775 = vld [vmem:[%s5 + $0x28] sm:$0xff]
        %v776 = vld [vmem:[%s5 + $0x30] sm:$0xff]
        %v777 = vld [vmem:[%s5 + $0x38] sm:$0xff]
        %v778 = vlaneseq
        %v779 = vshrl.u32 %v778, 7
        %v780 = vadd.s32 %v779, 8
        %v781 = vlaneseq
        %v782 = vand.u32 %v781, 127
        %v783 = vstv %s459
        %v784 = vadd.s32 %v783, 1
        %v785 = vadd.s32 %v783, 2
        %v786 = vadd.s32 %v783, 3
        %v787 = vadd.s32 %v783, 4
        %v788 = vadd.s32 %v783, 5
        %v789 = vadd.s32 %v783, 6
        %v790 = vadd.s32 %v783, 7
        %v791 = vadd.s32 %v783, 8
        %v792 = vadd.s32 %v783, 9
        %v793 = vadd.s32 %v783, 10
        %v794 = vadd.s32 %v783, 11
        %v795 = vadd.s32 %v783, 12
        %v796 = vadd.s32 %v783, 13
        %v797 = vadd.s32 %v783, 14
        %v798 = vadd.s32 %v783, 15
        %v799 = vsub.s32 %v783, %v779
        %v800 = vsub.s32 %v783, %v780
        %v801 = vsub.s32 %v784, %v779
        %v802 = vsub.s32 %v784, %v780
        %v803 = vsub.s32 %v785, %v779
        %v804 = vsub.s32 %v785, %v780
        %v805 = vsub.s32 %v786, %v779
        %v806 = vsub.s32 %v786, %v780
        %v807 = vsub.s32 %v787, %v779
        %v808 = vsub.s32 %v787, %v780
        %v809 = vsub.s32 %v788, %v779
        %v810 = vsub.s32 %v788, %v780
        %v811 = vsub.s32 %v789, %v779
        %v812 = vsub.s32 %v789, %v780
        %v813 = vsub.s32 %v790, %v779
        %v814 = vsub.s32 %v790, %v780
        %v815 = vsub.s32 %v791, %v779
        %v816 = vsub.s32 %v791, %v780
        %v817 = vsub.s32 %v792, %v779
        %v818 = vsub.s32 %v792, %v780
        %v819 = vsub.s32 %v793, %v779
        %v820 = vsub.s32 %v793, %v780
        %v821 = vsub.s32 %v794, %v779
        %v822 = vsub.s32 %v794, %v780
        %v823 = vsub.s32 %v795, %v779
        %v824 = vsub.s32 %v795, %v780
        %v825 = vsub.s32 %v796, %v779
        %v826 = vsub.s32 %v796, %v780
        %v827 = vsub.s32 %v797, %v779
        %v828 = vsub.s32 %v797, %v780
        %v829 = vsub.s32 %v798, %v779
        %v830 = vsub.s32 %v798, %v780
        %vm831 = vcmp.gt.s32.totalorder %v799, 4294967288
        %v832 = vsel %vm831, %v799, 4294967288
        %vm833 = vcmp.gt.s32.totalorder %v800, 4294967288
        %v834 = vsel %vm833, %v800, 4294967288
        %vm835 = vcmp.gt.s32.totalorder %v801, 4294967288
        %v836 = vsel %vm835, %v801, 4294967288
        %vm837 = vcmp.gt.s32.totalorder %v802, 4294967288
        %v838 = vsel %vm837, %v802, 4294967288
        %vm839 = vcmp.gt.s32.totalorder %v803, 4294967288
        %v840 = vsel %vm839, %v803, 4294967288
        %vm841 = vcmp.gt.s32.totalorder %v804, 4294967288
        %v842 = vsel %vm841, %v804, 4294967288
        %vm843 = vcmp.gt.s32.totalorder %v805, 4294967288
        %v844 = vsel %vm843, %v805, 4294967288
        %vm845 = vcmp.gt.s32.totalorder %v806, 4294967288
        %v846 = vsel %vm845, %v806, 4294967288
        %vm847 = vcmp.gt.s32.totalorder %v807, 4294967288
        %v848 = vsel %vm847, %v807, 4294967288
        %vm849 = vcmp.gt.s32.totalorder %v808, 4294967288
        %v850 = vsel %vm849, %v808, 4294967288
        %vm851 = vcmp.gt.s32.totalorder %v809, 4294967288
        %v852 = vsel %vm851, %v809, 4294967288
        %vm853 = vcmp.gt.s32.totalorder %v810, 4294967288
        %v854 = vsel %vm853, %v810, 4294967288
        %vm855 = vcmp.gt.s32.totalorder %v811, 4294967288
        %v856 = vsel %vm855, %v811, 4294967288
        %vm857 = vcmp.gt.s32.totalorder %v812, 4294967288
        %v858 = vsel %vm857, %v812, 4294967288
        %vm859 = vcmp.gt.s32.totalorder %v813, 4294967288
        %v860 = vsel %vm859, %v813, 4294967288
        %vm861 = vcmp.gt.s32.totalorder %v814, 4294967288
        %v862 = vsel %vm861, %v814, 4294967288
        %vm863 = vcmp.gt.s32.totalorder %v815, 4294967288
        %v864 = vsel %vm863, %v815, 4294967288
        %vm865 = vcmp.gt.s32.totalorder %v816, 4294967288
        %v866 = vsel %vm865, %v816, 4294967288
        %vm867 = vcmp.gt.s32.totalorder %v817, 4294967288
        %v868 = vsel %vm867, %v817, 4294967288
        %vm869 = vcmp.gt.s32.totalorder %v818, 4294967288
        %v870 = vsel %vm869, %v818, 4294967288
        %vm871 = vcmp.gt.s32.totalorder %v819, 4294967288
        %v872 = vsel %vm871, %v819, 4294967288
        %vm873 = vcmp.gt.s32.totalorder %v820, 4294967288
        %v874 = vsel %vm873, %v820, 4294967288
        %vm875 = vcmp.gt.s32.totalorder %v821, 4294967288
        %v876 = vsel %vm875, %v821, 4294967288
        %vm877 = vcmp.gt.s32.totalorder %v822, 4294967288
        %v878 = vsel %vm877, %v822, 4294967288
        %vm879 = vcmp.gt.s32.totalorder %v823, 4294967288
        %v880 = vsel %vm879, %v823, 4294967288
        %vm881 = vcmp.gt.s32.totalorder %v824, 4294967288
        %v882 = vsel %vm881, %v824, 4294967288
        %vm883 = vcmp.gt.s32.totalorder %v825, 4294967288
        %v884 = vsel %vm883, %v825, 4294967288
        %vm885 = vcmp.gt.s32.totalorder %v826, 4294967288
        %v886 = vsel %vm885, %v826, 4294967288
        %vm887 = vcmp.gt.s32.totalorder %v827, 4294967288
        %v888 = vsel %vm887, %v827, 4294967288
        %vm889 = vcmp.gt.s32.totalorder %v828, 4294967288
        %v890 = vsel %vm889, %v828, 4294967288
        %vm891 = vcmp.gt.s32.totalorder %v829, 4294967288
        %v892 = vsel %vm891, %v829, 4294967288
        %vm893 = vcmp.gt.s32.totalorder %v830, 4294967288
        %v894 = vsel %vm893, %v830, 4294967288
        %vm895 = vcmp.lt.s32.totalorder %v832, 8
        %v896 = vsel %vm895, %v832, 8
        %vm897 = vcmp.lt.s32.totalorder %v834, 8
        %v898 = vsel %vm897, %v834, 8
        %vm899 = vcmp.lt.s32.totalorder %v836, 8
        %v900 = vsel %vm899, %v836, 8
        %vm901 = vcmp.lt.s32.totalorder %v838, 8
        %v902 = vsel %vm901, %v838, 8
        %vm903 = vcmp.lt.s32.totalorder %v840, 8
        %v904 = vsel %vm903, %v840, 8
        %vm905 = vcmp.lt.s32.totalorder %v842, 8
        %v906 = vsel %vm905, %v842, 8
        %vm907 = vcmp.lt.s32.totalorder %v844, 8
        %v908 = vsel %vm907, %v844, 8
        %vm909 = vcmp.lt.s32.totalorder %v846, 8
        %v910 = vsel %vm909, %v846, 8
        %vm911 = vcmp.lt.s32.totalorder %v848, 8
        %v912 = vsel %vm911, %v848, 8
        %vm913 = vcmp.lt.s32.totalorder %v850, 8
        %v914 = vsel %vm913, %v850, 8
        %vm915 = vcmp.lt.s32.totalorder %v852, 8
        %v916 = vsel %vm915, %v852, 8
        %vm917 = vcmp.lt.s32.totalorder %v854, 8
        %v918 = vsel %vm917, %v854, 8
        %vm919 = vcmp.lt.s32.totalorder %v856, 8
        %v920 = vsel %vm919, %v856, 8
        %vm921 = vcmp.lt.s32.totalorder %v858, 8
        %v922 = vsel %vm921, %v858, 8
        %vm923 = vcmp.lt.s32.totalorder %v860, 8
        %v924 = vsel %vm923, %v860, 8
        %vm925 = vcmp.lt.s32.totalorder %v862, 8
        %v926 = vsel %vm925, %v862, 8
        %vm927 = vcmp.lt.s32.totalorder %v864, 8
        %v928 = vsel %vm927, %v864, 8
        %vm929 = vcmp.lt.s32.totalorder %v866, 8
        %v930 = vsel %vm929, %v866, 8
        %vm931 = vcmp.lt.s32.totalorder %v868, 8
        %v932 = vsel %vm931, %v868, 8
        %vm933 = vcmp.lt.s32.totalorder %v870, 8
        %v934 = vsel %vm933, %v870, 8
        %vm935 = vcmp.lt.s32.totalorder %v872, 8
        %v936 = vsel %vm935, %v872, 8
        %vm937 = vcmp.lt.s32.totalorder %v874, 8
        %v938 = vsel %vm937, %v874, 8
        %vm939 = vcmp.lt.s32.totalorder %v876, 8
        %v940 = vsel %vm939, %v876, 8
        %vm941 = vcmp.lt.s32.totalorder %v878, 8
        %v942 = vsel %vm941, %v878, 8
        %vm943 = vcmp.lt.s32.totalorder %v880, 8
        %v944 = vsel %vm943, %v880, 8
        %vm945 = vcmp.lt.s32.totalorder %v882, 8
        %v946 = vsel %vm945, %v882, 8
        %vm947 = vcmp.lt.s32.totalorder %v884, 8
        %v948 = vsel %vm947, %v884, 8
        %vm949 = vcmp.lt.s32.totalorder %v886, 8
        %v950 = vsel %vm949, %v886, 8
        %vm951 = vcmp.lt.s32.totalorder %v888, 8
        %v952 = vsel %vm951, %v888, 8
        %vm953 = vcmp.lt.s32.totalorder %v890, 8
        %v954 = vsel %vm953, %v890, 8
        %vm955 = vcmp.lt.s32.totalorder %v892, 8
        %v956 = vsel %vm955, %v892, 8
        %vm957 = vcmp.lt.s32.totalorder %v894, 8
        %v958 = vsel %vm957, %v894, 8
        %v959 = vadd.s32 %v896, 8
        %v960 = vadd.s32 %v898, 8
        %v961 = vadd.s32 %v900, 8
        %v962 = vadd.s32 %v902, 8
        %v963 = vadd.s32 %v904, 8
        %v964 = vadd.s32 %v906, 8
        %v965 = vadd.s32 %v908, 8
        %v966 = vadd.s32 %v910, 8
        %v967 = vadd.s32 %v912, 8
        %v968 = vadd.s32 %v914, 8
        %v969 = vadd.s32 %v916, 8
        %v970 = vadd.s32 %v918, 8
        %v971 = vadd.s32 %v920, 8
        %v972 = vadd.s32 %v922, 8
        %v973 = vadd.s32 %v924, 8
        %v974 = vadd.s32 %v926, 8
        %v975 = vadd.s32 %v928, 8
        %v976 = vadd.s32 %v930, 8
        %v977 = vadd.s32 %v932, 8
        %v978 = vadd.s32 %v934, 8
        %v979 = vadd.s32 %v936, 8
        %v980 = vadd.s32 %v938, 8
        %v981 = vadd.s32 %v940, 8
        %v982 = vadd.s32 %v942, 8
        %v983 = vadd.s32 %v944, 8
        %v984 = vadd.s32 %v946, 8
        %v985 = vadd.s32 %v948, 8
        %v986 = vadd.s32 %v950, 8
        %v987 = vadd.s32 %v952, 8
        %v988 = vadd.s32 %v954, 8
        %v989 = vadd.s32 %v956, 8
        %v990 = vadd.s32 %v958, 8
        %vm991 = vcmp.eq.s32.totalorder %v959, %v782
        %vm992 = vcmp.eq.s32.totalorder %v960, %v782
        %vm993 = vcmp.eq.s32.totalorder %v961, %v782
        %vm994 = vcmp.eq.s32.totalorder %v962, %v782
        %vm995 = vcmp.eq.s32.totalorder %v963, %v782
        %vm996 = vcmp.eq.s32.totalorder %v964, %v782
        %vm997 = vcmp.eq.s32.totalorder %v965, %v782
        %vm998 = vcmp.eq.s32.totalorder %v966, %v782
        %vm999 = vcmp.eq.s32.totalorder %v967, %v782
        %vm1000 = vcmp.eq.s32.totalorder %v968, %v782
        %vm1001 = vcmp.eq.s32.totalorder %v969, %v782
        %vm1002 = vcmp.eq.s32.totalorder %v970, %v782
        %vm1003 = vcmp.eq.s32.totalorder %v971, %v782
        %vm1004 = vcmp.eq.s32.totalorder %v972, %v782
        %vm1005 = vcmp.eq.s32.totalorder %v973, %v782
        %vm1006 = vcmp.eq.s32.totalorder %v974, %v782
        %vm1007 = vcmp.eq.s32.totalorder %v975, %v782
        %vm1008 = vcmp.eq.s32.totalorder %v976, %v782
        %vm1009 = vcmp.eq.s32.totalorder %v977, %v782
        %vm1010 = vcmp.eq.s32.totalorder %v978, %v782
        %vm1011 = vcmp.eq.s32.totalorder %v979, %v782
        %vm1012 = vcmp.eq.s32.totalorder %v980, %v782
        %vm1013 = vcmp.eq.s32.totalorder %v981, %v782
        %vm1014 = vcmp.eq.s32.totalorder %v982, %v782
        %vm1015 = vcmp.eq.s32.totalorder %v983, %v782
        %vm1016 = vcmp.eq.s32.totalorder %v984, %v782
        %vm1017 = vcmp.eq.s32.totalorder %v985, %v782
        %vm1018 = vcmp.eq.s32.totalorder %v986, %v782
        %vm1019 = vcmp.eq.s32.totalorder %v987, %v782
        %vm1020 = vcmp.eq.s32.totalorder %v988, %v782
        %vm1021 = vcmp.eq.s32.totalorder %v989, %v782
        %vm1022 = vcmp.eq.s32.totalorder %v990, %v782
        %v1023 = vsel %vm991, 1, 0
        %v1024 = vsel %vm992, 1, 0
        %v1025 = vsel %vm993, 1, 0
        %v1026 = vsel %vm994, 1, 0
        %v1027 = vsel %vm995, 1, 0
        %v1028 = vsel %vm996, 1, 0
        %v1029 = vsel %vm997, 1, 0
        %v1030 = vsel %vm998, 1, 0
        %v1031 = vsel %vm999, 1, 0
        %v1032 = vsel %vm1000, 1, 0
        %v1033 = vsel %vm1001, 1, 0
        %v1034 = vsel %vm1002, 1, 0
        %v1035 = vsel %vm1003, 1, 0
        %v1036 = vsel %vm1004, 1, 0
        %v1037 = vsel %vm1005, 1, 0
        %v1038 = vsel %vm1006, 1, 0
        %v1039 = vsel %vm1007, 1, 0
        %v1040 = vsel %vm1008, 1, 0
        %v1041 = vsel %vm1009, 1, 0
        %v1042 = vsel %vm1010, 1, 0
        %v1043 = vsel %vm1011, 1, 0
        %v1044 = vsel %vm1012, 1, 0
        %v1045 = vsel %vm1013, 1, 0
        %v1046 = vsel %vm1014, 1, 0
        %v1047 = vsel %vm1015, 1, 0
        %v1048 = vsel %vm1016, 1, 0
        %v1049 = vsel %vm1017, 1, 0
        %v1050 = vsel %vm1018, 1, 0
        %v1051 = vsel %vm1019, 1, 0
        %v1052 = vsel %vm1020, 1, 0
        %v1053 = vsel %vm1021, 1, 0
        %v1054 = vsel %vm1022, 1, 0
        %v1055 = vcvt.s32.f32 %v1023
        %v1056 = vcvt.s32.f32 %v1024
        %v1057 = vcvt.s32.f32 %v1025
        %v1058 = vcvt.s32.f32 %v1026
        %v1059 = vcvt.s32.f32 %v1027
        %v1060 = vcvt.s32.f32 %v1028
        %v1061 = vcvt.s32.f32 %v1029
        %v1062 = vcvt.s32.f32 %v1030
        %v1063 = vcvt.s32.f32 %v1031
        %v1064 = vcvt.s32.f32 %v1032
        %v1065 = vcvt.s32.f32 %v1033
        %v1066 = vcvt.s32.f32 %v1034
        %v1067 = vcvt.s32.f32 %v1035
        %v1068 = vcvt.s32.f32 %v1036
        %v1069 = vcvt.s32.f32 %v1037
        %v1070 = vcvt.s32.f32 %v1038
        %v1071 = vcvt.s32.f32 %v1039
        %v1072 = vcvt.s32.f32 %v1040
        %v1073 = vcvt.s32.f32 %v1041
        %v1074 = vcvt.s32.f32 %v1042
        %v1075 = vcvt.s32.f32 %v1043
        %v1076 = vcvt.s32.f32 %v1044
        %v1077 = vcvt.s32.f32 %v1045
        %v1078 = vcvt.s32.f32 %v1046
        %v1079 = vcvt.s32.f32 %v1047
        %v1080 = vcvt.s32.f32 %v1048
        %v1081 = vcvt.s32.f32 %v1049
        %v1082 = vcvt.s32.f32 %v1050
        %v1083 = vcvt.s32.f32 %v1051
        %v1084 = vcvt.s32.f32 %v1052
        %v1085 = vcvt.s32.f32 %v1053
        %v1086 = vcvt.s32.f32 %v1054
        %v1087 = vld [vmem:[#allocation3] sm:$0xff]
        %v1088 = vld [vmem:[#allocation3 + $0x8] sm:$0xff]
        %v1089 = vld [vmem:[#allocation3 + $0x10] sm:$0xff]
        %v1090 = vld [vmem:[#allocation3 + $0x18] sm:$0xff]
        %v1092 = vsel %vm474, %v1055, 0
        %v1095 = vsel %vm474, %v1056, 0
        %v1098 = vsel %vm474, %v1057, 0
        %v1101 = vsel %vm474, %v1058, 0
        %v1104 = vsel %vm474, %v1059, 0
        %v1107 = vsel %vm474, %v1060, 0
        %v1110 = vsel %vm474, %v1061, 0
        %v1113 = vsel %vm474, %v1062, 0
        %v1116 = vsel %vm474, %v1063, 0
        %v1119 = vsel %vm474, %v1064, 0
        %v1122 = vsel %vm474, %v1065, 0
        %v1125 = vsel %vm474, %v1066, 0
        %v1128 = vsel %vm474, %v1067, 0
        %v1131 = vsel %vm474, %v1068, 0
        %v1134 = vsel %vm474, %v1069, 0
        %v1137 = vsel %vm474, %v1070, 0
        %v1140 = vsel %vm474, %v1071, 0
        %v1143 = vsel %vm474, %v1072, 0
        %v1146 = vsel %vm474, %v1073, 0
        %v1149 = vsel %vm474, %v1074, 0
        %v1152 = vsel %vm474, %v1075, 0
        %v1155 = vsel %vm474, %v1076, 0
        %v1158 = vsel %vm474, %v1077, 0
        %v1161 = vsel %vm474, %v1078, 0
        %v1164 = vsel %vm474, %v1079, 0
        %v1167 = vsel %vm474, %v1080, 0
        %v1170 = vsel %vm474, %v1081, 0
        %v1173 = vsel %vm474, %v1082, 0
        %v1176 = vsel %vm474, %v1083, 0
        %v1179 = vsel %vm474, %v1084, 0
        %v1182 = vsel %vm474, %v1085, 0
        %v1185 = vsel %vm474, %v1086, 0
        %1187 = vmatprep.subr.mxu0 0.0
        %1188 = vmatpush1.msra.mxu0 0.0
        %1189 = vmatprep.subr.mxu0 0.0
        %1190 = vmatpush1.msra.mxu0 0.0
        %1191 = vmatprep.subr.mxu0 0.0
        %1192 = vmatpush1.msra.mxu0 0.0
        %1193 = vmatprep.subr.mxu0 0.0
        %1194 = vmatpush1.msra.mxu0 0.0
        %1195 = vmatprep.subr.mxu0 0.0
        %1196 = vmatpush1.msra.mxu0 0.0
        %1197 = vmatprep.subr.mxu0 0.0
        %1198 = vmatpush1.msra.mxu0 0.0
        %1199 = vmatprep.subr.mxu0 0.0
        %1200 = vmatpush1.msra.mxu0 0.0
        %1201 = vmatprep.subr.mxu0 0.0
        %1202 = vmatpush1.msra.mxu0 0.0
        %1203 = vmatprep.subr.mxu0 0.0
        %1204 = vmatpush1.msra.mxu0 0.0
        %1205 = vmatprep.subr.mxu0 0.0
        %1206 = vmatpush1.msra.mxu0 0.0
        %1207 = vmatprep.subr.mxu0 0.0
        %1208 = vmatpush1.msra.mxu0 0.0
        %1209 = vmatprep.subr.mxu0 0.0
        %1210 = vmatpush1.msra.mxu0 0.0
        %1211 = vmatprep.subr.mxu0 0.0
        %1212 = vmatpush1.msra.mxu0 %v1090
        %1213 = vmatprep.subr.mxu0 0.0
        %1214 = vmatpush1.msra.mxu0 %v1089
        %1215 = vmatprep.subr.mxu0 0.0
        %1216 = vmatpush1.msra.mxu0 %v1088
        %1217 = vmatprep.subr.mxu0 0.0
        %1218 = vmatpush1.msra.mxu0 %v1087
        %1219 = vmatprep.subr.mxu0 0.0
        %1220 = vmatpush2.msra.mxu0 0.0
        %1221 = vmatprep.subr.mxu0 0.0
        %1222 = vmatpush2.msra.mxu0 0.0
        %1223 = vmatprep.subr.mxu0 0.0
        %1224 = vmatpush2.msra.mxu0 0.0
        %1225 = vmatprep.subr.mxu0 0.0
        %1226 = vmatpush2.msra.mxu0 0.0
        %1227 = vmatprep.subr.mxu0 0.0
        %1228 = vmatpush2.msra.mxu0 0.0
        %1229 = vmatprep.subr.mxu0 0.0
        %1230 = vmatpush2.msra.mxu0 0.0
        %1231 = vmatprep.subr.mxu0 0.0
        %1232 = vmatpush2.msra.mxu0 0.0
        %1233 = vmatprep.subr.mxu0 0.0
        %1234 = vmatpush2.msra.mxu0 0.0
        %1235 = vmatprep.subr.mxu0 0.0
        %1236 = vmatpush2.msra.mxu0 0.0
        %1237 = vmatprep.subr.mxu0 0.0
        %1238 = vmatpush2.msra.mxu0 0.0
        %1239 = vmatprep.subr.mxu0 0.0
        %1240 = vmatpush2.msra.mxu0 0.0
        %1241 = vmatprep.subr.mxu0 0.0
        %1242 = vmatpush2.msra.mxu0 0.0
        %1243 = vmatprep.subr.mxu0 0.0
        %1244 = vmatpush2.msra.mxu0 0.0
        %1245 = vmatprep.subr.mxu0 0.0
        %1246 = vmatpush2.msra.mxu0 0.0
        %1247 = vmatprep.subr.mxu0 0.0
        %1248 = vmatpush2.msra.mxu0 0.0
        %1249 = vmatprep.subr.mxu0 0.0
        %1250 = vmatpush2.msra.mxu0 0.0
        %1251 = vmatprep.mubr.f32.mxu0 0.0
        %1252 = vmatmul.mubr.f32.gmra.mxu0 %v1092
        %v1253 = vpop.f32.mrf.mxu0
        %v1254 = vadd.f32 0.0, %v1253
        %v1255 = vpop.f32.mrf.mxu0
        %1256 = vmatprep.mubr.f32.mxu0 0.0
        %1257 = vmatmul.mubr.f32.gmra.mxu0 %v1095
        %v1258 = vpop.f32.mrf.mxu0
        %v1259 = vadd.f32 0.0, %v1258
        %v1260 = vpop.f32.mrf.mxu0
        %1261 = vmatprep.mubr.f32.mxu0 0.0
        %1262 = vmatmul.mubr.f32.gmra.mxu0 %v1098
        %v1263 = vpop.f32.mrf.mxu0
        %v1264 = vadd.f32 0.0, %v1263
        %v1265 = vpop.f32.mrf.mxu0
        %1266 = vmatprep.mubr.f32.mxu0 0.0
        %1267 = vmatmul.mubr.f32.gmra.mxu0 %v1101
        %v1268 = vpop.f32.mrf.mxu0
        %v1269 = vadd.f32 0.0, %v1268
        %v1270 = vpop.f32.mrf.mxu0
        %1271 = vmatprep.mubr.f32.mxu0 0.0
        %1272 = vmatmul.mubr.f32.gmra.mxu0 %v1104
        %v1273 = vpop.f32.mrf.mxu0
        %v1274 = vadd.f32 0.0, %v1273
        %v1275 = vpop.f32.mrf.mxu0
        %1276 = vmatprep.mubr.f32.mxu0 0.0
        %1277 = vmatmul.mubr.f32.gmra.mxu0 %v1107
        %v1278 = vpop.f32.mrf.mxu0
        %v1279 = vadd.f32 0.0, %v1278
        %v1280 = vpop.f32.mrf.mxu0
        %1281 = vmatprep.mubr.f32.mxu0 0.0
        %1282 = vmatmul.mubr.f32.gmra.mxu0 %v1110
        %v1283 = vpop.f32.mrf.mxu0
        %v1284 = vadd.f32 0.0, %v1283
        %v1285 = vpop.f32.mrf.mxu0
        %1286 = vmatprep.mubr.f32.mxu0 0.0
        %1287 = vmatmul.mubr.f32.gmra.mxu0 %v1113
        %v1288 = vpop.f32.mrf.mxu0
        %v1289 = vadd.f32 0.0, %v1288
        %v1290 = vpop.f32.mrf.mxu0
        %1291 = vmatprep.mubr.f32.mxu0 0.0
        %1292 = vmatmul.mubr.f32.gmra.mxu0 %v1116
        %v1293 = vpop.f32.mrf.mxu0
        %v1294 = vadd.f32 0.0, %v1293
        %v1295 = vpop.f32.mrf.mxu0
        %1296 = vmatprep.mubr.f32.mxu0 0.0
        %1297 = vmatmul.mubr.f32.gmra.mxu0 %v1119
        %v1298 = vpop.f32.mrf.mxu0
        %v1299 = vadd.f32 0.0, %v1298
        %v1300 = vpop.f32.mrf.mxu0
        %1301 = vmatprep.mubr.f32.mxu0 0.0
        %1302 = vmatmul.mubr.f32.gmra.mxu0 %v1122
        %v1303 = vpop.f32.mrf.mxu0
        %v1304 = vadd.f32 0.0, %v1303
        %v1305 = vpop.f32.mrf.mxu0
        %1306 = vmatprep.mubr.f32.mxu0 0.0
        %1307 = vmatmul.mubr.f32.gmra.mxu0 %v1125
        %v1308 = vpop.f32.mrf.mxu0
        %v1309 = vadd.f32 0.0, %v1308
        %v1310 = vpop.f32.mrf.mxu0
        %1311 = vmatprep.mubr.f32.mxu0 0.0
        %1312 = vmatmul.mubr.f32.gmra.mxu0 %v1128
        %v1313 = vpop.f32.mrf.mxu0
        %v1314 = vadd.f32 0.0, %v1313
        %v1315 = vpop.f32.mrf.mxu0
        %1316 = vmatprep.mubr.f32.mxu0 0.0
        %1317 = vmatmul.mubr.f32.gmra.mxu0 %v1131
        %v1318 = vpop.f32.mrf.mxu0
        %v1319 = vadd.f32 0.0, %v1318
        %v1320 = vpop.f32.mrf.mxu0
        %1321 = vmatprep.mubr.f32.mxu0 0.0
        %1322 = vmatmul.mubr.f32.gmra.mxu0 %v1134
        %v1323 = vpop.f32.mrf.mxu0
        %v1324 = vadd.f32 0.0, %v1323
        %v1325 = vpop.f32.mrf.mxu0
        %1326 = vmatprep.mubr.f32.mxu0 0.0
        %1327 = vmatmul.mubr.f32.gmra.mxu0 %v1137
        %v1328 = vpop.f32.mrf.mxu0
        %v1329 = vadd.f32 0.0, %v1328
        %v1330 = vpop.f32.mrf.mxu0
        %1331 = vmatprep.mubr.f32.mxu0 0.0
        %1332 = vmatmul.mubr.f32.gmra.mxu0 %v1140
        %v1333 = vpop.f32.mrf.mxu0
        %v1334 = vadd.f32 0.0, %v1333
        %v1335 = vpop.f32.mrf.mxu0
        %1336 = vmatprep.mubr.f32.mxu0 0.0
        %1337 = vmatmul.mubr.f32.gmra.mxu0 %v1143
        %v1338 = vpop.f32.mrf.mxu0
        %v1339 = vadd.f32 0.0, %v1338
        %v1340 = vpop.f32.mrf.mxu0
        %1341 = vmatprep.mubr.f32.mxu0 0.0
        %1342 = vmatmul.mubr.f32.gmra.mxu0 %v1146
        %v1343 = vpop.f32.mrf.mxu0
        %v1344 = vadd.f32 0.0, %v1343
        %v1345 = vpop.f32.mrf.mxu0
        %1346 = vmatprep.mubr.f32.mxu0 0.0
        %1347 = vmatmul.mubr.f32.gmra.mxu0 %v1149
        %v1348 = vpop.f32.mrf.mxu0
        %v1349 = vadd.f32 0.0, %v1348
        %v1350 = vpop.f32.mrf.mxu0
        %1351 = vmatprep.mubr.f32.mxu0 0.0
        %1352 = vmatmul.mubr.f32.gmra.mxu0 %v1152
        %v1353 = vpop.f32.mrf.mxu0
        %v1354 = vadd.f32 0.0, %v1353
        %v1355 = vpop.f32.mrf.mxu0
        %1356 = vmatprep.mubr.f32.mxu0 0.0
        %1357 = vmatmul.mubr.f32.gmra.mxu0 %v1155
        %v1358 = vpop.f32.mrf.mxu0
        %v1359 = vadd.f32 0.0, %v1358
        %v1360 = vpop.f32.mrf.mxu0
        %1361 = vmatprep.mubr.f32.mxu0 0.0
        %1362 = vmatmul.mubr.f32.gmra.mxu0 %v1158
        %v1363 = vpop.f32.mrf.mxu0
        %v1364 = vadd.f32 0.0, %v1363
        %v1365 = vpop.f32.mrf.mxu0
        %1366 = vmatprep.mubr.f32.mxu0 0.0
        %1367 = vmatmul.mubr.f32.gmra.mxu0 %v1161
        %v1368 = vpop.f32.mrf.mxu0
        %v1369 = vadd.f32 0.0, %v1368
        %v1370 = vpop.f32.mrf.mxu0
        %1371 = vmatprep.mubr.f32.mxu0 0.0
        %1372 = vmatmul.mubr.f32.gmra.mxu0 %v1164
        %v1373 = vpop.f32.mrf.mxu0
        %v1374 = vadd.f32 0.0, %v1373
        %v1375 = vpop.f32.mrf.mxu0
        %1376 = vmatprep.mubr.f32.mxu0 0.0
        %1377 = vmatmul.mubr.f32.gmra.mxu0 %v1167
        %v1378 = vpop.f32.mrf.mxu0
        %v1379 = vadd.f32 0.0, %v1378
        %v1380 = vpop.f32.mrf.mxu0
        %1381 = vmatprep.mubr.f32.mxu0 0.0
        %1382 = vmatmul.mubr.f32.gmra.mxu0 %v1170
        %v1383 = vpop.f32.mrf.mxu0
        %v1384 = vadd.f32 0.0, %v1383
        %v1385 = vpop.f32.mrf.mxu0
        %1386 = vmatprep.mubr.f32.mxu0 0.0
        %1387 = vmatmul.mubr.f32.gmra.mxu0 %v1173
        %v1388 = vpop.f32.mrf.mxu0
        %v1389 = vadd.f32 0.0, %v1388
        %v1390 = vpop.f32.mrf.mxu0
        %1391 = vmatprep.mubr.f32.mxu0 0.0
        %1392 = vmatmul.mubr.f32.gmra.mxu0 %v1176
        %v1393 = vpop.f32.mrf.mxu0
        %v1394 = vadd.f32 0.0, %v1393
        %v1395 = vpop.f32.mrf.mxu0
        %1396 = vmatprep.mubr.f32.mxu0 0.0
        %1397 = vmatmul.mubr.f32.gmra.mxu0 %v1179
        %v1398 = vpop.f32.mrf.mxu0
        %v1399 = vadd.f32 0.0, %v1398
        %v1400 = vpop.f32.mrf.mxu0
        %1401 = vmatprep.mubr.f32.mxu0 0.0
        %1402 = vmatmul.mubr.f32.gmra.mxu0 %v1182
        %v1403 = vpop.f32.mrf.mxu0
        %v1404 = vadd.f32 0.0, %v1403
        %v1405 = vpop.f32.mrf.mxu0
        %1406 = vmatprep.mubr.f32.mxu0 0.0
        %1407 = vmatmul.mubr.f32.gmra.mxu0 %v1185
        %v1408 = vpop.f32.mrf.mxu0
        %v1409 = vadd.f32 0.0, %v1408
        %v1410 = vpop.f32.mrf.mxu0
        %1411 = vdwg.mxu0
        %vm1412 = vcmask 523264
        %v1414 = vsel %vm1412, %v738, 0
        %v1417 = vsel %vm1412, %v739, 0
        %v1420 = vsel %vm1412, %v740, 0
        %v1423 = vsel %vm1412, %v741, 0
        %v1426 = vsel %vm1412, %v742, 0
        %v1429 = vsel %vm1412, %v743, 0
        %v1432 = vsel %vm1412, %v744, 0
        %v1435 = vsel %vm1412, %v745, 0
        %v1438 = vsel %vm1412, %v746, 0
        %v1441 = vsel %vm1412, %v747, 0
        %v1444 = vsel %vm1412, %v748, 0
        %v1447 = vsel %vm1412, %v749, 0
        %v1450 = vsel %vm1412, %v750, 0
        %v1453 = vsel %vm1412, %v751, 0
        %v1456 = vsel %vm1412, %v752, 0
        %v1459 = vsel %vm1412, %v753, 0
        %v1462 = vsel %vm1412, %v754, 0
        %v1465 = vsel %vm1412, %v755, 0
        %v1468 = vsel %vm1412, %v756, 0
        %v1471 = vsel %vm1412, %v757, 0
        %v1474 = vsel %vm1412, %v758, 0
        %v1477 = vsel %vm1412, %v759, 0
        %v1480 = vsel %vm1412, %v760, 0
        %v1483 = vsel %vm1412, %v761, 0
        %v1486 = vsel %vm1412, %v762, 0
        %v1489 = vsel %vm1412, %v763, 0
        %v1492 = vsel %vm1412, %v764, 0
        %v1495 = vsel %vm1412, %v765, 0
        %v1498 = vsel %vm1412, %v766, 0
        %v1501 = vsel %vm1412, %v767, 0
        %v1504 = vsel %vm1412, %v768, 0
        %v1507 = vsel %vm1412, %v769, 0
        %1509 = vmatprep.subr.mxu0 0.0
        %1510 = vmatpush1.msra.mxu0 0.0
        %1511 = vmatprep.subr.mxu0 0.0
        %1512 = vmatpush1.msra.mxu0 0.0
        %1513 = vmatprep.subr.mxu0 0.0
        %1514 = vmatpush1.msra.mxu0 0.0
        %1515 = vmatprep.subr.mxu0 0.0
        %1516 = vmatpush1.msra.mxu0 0.0
        %1517 = vmatprep.subr.mxu0 0.0
        %1518 = vmatpush1.msra.mxu0 0.0
        %1519 = vmatprep.subr.mxu0 0.0
        %1520 = vmatpush1.msra.mxu0 0.0
        %1521 = vmatprep.subr.mxu0 0.0
        %1522 = vmatpush1.msra.mxu0 0.0
        %1523 = vmatprep.subr.mxu0 0.0
        %1524 = vmatpush1.msra.mxu0 0.0
        %1525 = vmatprep.subr.mxu0 0.0
        %1526 = vmatpush1.msra.mxu0 %v777
        %1527 = vmatprep.subr.mxu0 0.0
        %1528 = vmatpush1.msra.mxu0 %v776
        %1529 = vmatprep.subr.mxu0 0.0
        %1530 = vmatpush1.msra.mxu0 %v775
        %1531 = vmatprep.subr.mxu0 0.0
        %1532 = vmatpush1.msra.mxu0 %v774
        %1533 = vmatprep.subr.mxu0 0.0
        %1534 = vmatpush1.msra.mxu0 %v773
        %1535 = vmatprep.subr.mxu0 0.0
        %1536 = vmatpush1.msra.mxu0 %v772
        %1537 = vmatprep.subr.mxu0 0.0
        %1538 = vmatpush1.msra.mxu0 %v771
        %1539 = vmatprep.subr.mxu0 0.0
        %1540 = vmatpush1.msra.mxu0 %v770
        %1541 = vmatprep.subr.mxu0 0.0
        %1542 = vmatpush2.msra.mxu0 0.0
        %1543 = vmatprep.subr.mxu0 0.0
        %1544 = vmatpush2.msra.mxu0 0.0
        %1545 = vmatprep.subr.mxu0 0.0
        %1546 = vmatpush2.msra.mxu0 0.0
        %1547 = vmatprep.subr.mxu0 0.0
        %1548 = vmatpush2.msra.mxu0 0.0
        %1549 = vmatprep.subr.mxu0 0.0
        %1550 = vmatpush2.msra.mxu0 0.0
        %1551 = vmatprep.subr.mxu0 0.0
        %1552 = vmatpush2.msra.mxu0 0.0
        %1553 = vmatprep.subr.mxu0 0.0
        %1554 = vmatpush2.msra.mxu0 0.0
        %1555 = vmatprep.subr.mxu0 0.0
        %1556 = vmatpush2.msra.mxu0 0.0
        %1557 = vmatprep.subr.mxu0 0.0
        %1558 = vmatpush2.msra.mxu0 0.0
        %1559 = vmatprep.subr.mxu0 0.0
        %1560 = vmatpush2.msra.mxu0 0.0
        %1561 = vmatprep.subr.mxu0 0.0
        %1562 = vmatpush2.msra.mxu0 0.0
        %1563 = vmatprep.subr.mxu0 0.0
        %1564 = vmatpush2.msra.mxu0 0.0
        %1565 = vmatprep.subr.mxu0 0.0
        %1566 = vmatpush2.msra.mxu0 0.0
        %1567 = vmatprep.subr.mxu0 0.0
        %1568 = vmatpush2.msra.mxu0 0.0
        %1569 = vmatprep.subr.mxu0 0.0
        %1570 = vmatpush2.msra.mxu0 0.0
        %1571 = vmatprep.subr.mxu0 0.0
        %1572 = vmatpush2.msra.mxu0 0.0
        %1573 = vmatprep.mubr.f32.mxu0 0.0
        %1574 = vmatmul.mubr.f32.gmra.mxu0 %v1414
        %v1575 = vpop.f32.mrf.mxu0
        %v1576 = vadd.f32 %v1254, %v1575
        %v1577 = vpop.f32.mrf.mxu0
        %1578 = vmatprep.mubr.f32.mxu0 0.0
        %1579 = vmatmul.mubr.f32.gmra.mxu0 %v1417
        %v1580 = vpop.f32.mrf.mxu0
        %v1581 = vadd.f32 %v1259, %v1580
        %v1582 = vpop.f32.mrf.mxu0
        %1583 = vmatprep.mubr.f32.mxu0 0.0
        %1584 = vmatmul.mubr.f32.gmra.mxu0 %v1420
        %v1585 = vpop.f32.mrf.mxu0
        %v1586 = vadd.f32 %v1264, %v1585
        %v1587 = vpop.f32.mrf.mxu0
        %1588 = vmatprep.mubr.f32.mxu0 0.0
        %1589 = vmatmul.mubr.f32.gmra.mxu0 %v1423
        %v1590 = vpop.f32.mrf.mxu0
        %v1591 = vadd.f32 %v1269, %v1590
        %v1592 = vpop.f32.mrf.mxu0
        %1593 = vmatprep.mubr.f32.mxu0 0.0
        %1594 = vmatmul.mubr.f32.gmra.mxu0 %v1426
        %v1595 = vpop.f32.mrf.mxu0
        %v1596 = vadd.f32 %v1274, %v1595
        %v1597 = vpop.f32.mrf.mxu0
        %1598 = vmatprep.mubr.f32.mxu0 0.0
        %1599 = vmatmul.mubr.f32.gmra.mxu0 %v1429
        %v1600 = vpop.f32.mrf.mxu0
        %v1601 = vadd.f32 %v1279, %v1600
        %v1602 = vpop.f32.mrf.mxu0
        %1603 = vmatprep.mubr.f32.mxu0 0.0
        %1604 = vmatmul.mubr.f32.gmra.mxu0 %v1432
        %v1605 = vpop.f32.mrf.mxu0
        %v1606 = vadd.f32 %v1284, %v1605
        %v1607 = vpop.f32.mrf.mxu0
        %1608 = vmatprep.mubr.f32.mxu0 0.0
        %1609 = vmatmul.mubr.f32.gmra.mxu0 %v1435
        %v1610 = vpop.f32.mrf.mxu0
        %v1611 = vadd.f32 %v1289, %v1610
        %v1612 = vpop.f32.mrf.mxu0
        %1613 = vmatprep.mubr.f32.mxu0 0.0
        %1614 = vmatmul.mubr.f32.gmra.mxu0 %v1438
        %v1615 = vpop.f32.mrf.mxu0
        %v1616 = vadd.f32 %v1294, %v1615
        %v1617 = vpop.f32.mrf.mxu0
        %1618 = vmatprep.mubr.f32.mxu0 0.0
        %1619 = vmatmul.mubr.f32.gmra.mxu0 %v1441
        %v1620 = vpop.f32.mrf.mxu0
        %v1621 = vadd.f32 %v1299, %v1620
        %v1622 = vpop.f32.mrf.mxu0
        %1623 = vmatprep.mubr.f32.mxu0 0.0
        %1624 = vmatmul.mubr.f32.gmra.mxu0 %v1444
        %v1625 = vpop.f32.mrf.mxu0
        %v1626 = vadd.f32 %v1304, %v1625
        %v1627 = vpop.f32.mrf.mxu0
        %1628 = vmatprep.mubr.f32.mxu0 0.0
        %1629 = vmatmul.mubr.f32.gmra.mxu0 %v1447
        %v1630 = vpop.f32.mrf.mxu0
        %v1631 = vadd.f32 %v1309, %v1630
        %v1632 = vpop.f32.mrf.mxu0
        %1633 = vmatprep.mubr.f32.mxu0 0.0
        %1634 = vmatmul.mubr.f32.gmra.mxu0 %v1450
        %v1635 = vpop.f32.mrf.mxu0
        %v1636 = vadd.f32 %v1314, %v1635
        %v1637 = vpop.f32.mrf.mxu0
        %1638 = vmatprep.mubr.f32.mxu0 0.0
        %1639 = vmatmul.mubr.f32.gmra.mxu0 %v1453
        %v1640 = vpop.f32.mrf.mxu0
        %v1641 = vadd.f32 %v1319, %v1640
        %v1642 = vpop.f32.mrf.mxu0
        %1643 = vmatprep.mubr.f32.mxu0 0.0
        %1644 = vmatmul.mubr.f32.gmra.mxu0 %v1456
        %v1645 = vpop.f32.mrf.mxu0
        %v1646 = vadd.f32 %v1324, %v1645
        %v1647 = vpop.f32.mrf.mxu0
        %1648 = vmatprep.mubr.f32.mxu0 0.0
        %1649 = vmatmul.mubr.f32.gmra.mxu0 %v1459
        %v1650 = vpop.f32.mrf.mxu0
        %v1651 = vadd.f32 %v1329, %v1650
        %v1652 = vpop.f32.mrf.mxu0
        %1653 = vmatprep.mubr.f32.mxu0 0.0
        %1654 = vmatmul.mubr.f32.gmra.mxu0 %v1462
        %v1655 = vpop.f32.mrf.mxu0
        %v1656 = vadd.f32 %v1334, %v1655
        %v1657 = vpop.f32.mrf.mxu0
        %1658 = vmatprep.mubr.f32.mxu0 0.0
        %1659 = vmatmul.mubr.f32.gmra.mxu0 %v1465
        %v1660 = vpop.f32.mrf.mxu0
        %v1661 = vadd.f32 %v1339, %v1660
        %v1662 = vpop.f32.mrf.mxu0
        %1663 = vmatprep.mubr.f32.mxu0 0.0
        %1664 = vmatmul.mubr.f32.gmra.mxu0 %v1468
        %v1665 = vpop.f32.mrf.mxu0
        %v1666 = vadd.f32 %v1344, %v1665
        %v1667 = vpop.f32.mrf.mxu0
        %1668 = vmatprep.mubr.f32.mxu0 0.0
        %1669 = vmatmul.mubr.f32.gmra.mxu0 %v1471
        %v1670 = vpop.f32.mrf.mxu0
        %v1671 = vadd.f32 %v1349, %v1670
        %v1672 = vpop.f32.mrf.mxu0
        %1673 = vmatprep.mubr.f32.mxu0 0.0
        %1674 = vmatmul.mubr.f32.gmra.mxu0 %v1474
        %v1675 = vpop.f32.mrf.mxu0
        %v1676 = vadd.f32 %v1354, %v1675
        %v1677 = vpop.f32.mrf.mxu0
        %1678 = vmatprep.mubr.f32.mxu0 0.0
        %1679 = vmatmul.mubr.f32.gmra.mxu0 %v1477
        %v1680 = vpop.f32.mrf.mxu0
        %v1681 = vadd.f32 %v1359, %v1680
        %v1682 = vpop.f32.mrf.mxu0
        %1683 = vmatprep.mubr.f32.mxu0 0.0
        %1684 = vmatmul.mubr.f32.gmra.mxu0 %v1480
        %v1685 = vpop.f32.mrf.mxu0
        %v1686 = vadd.f32 %v1364, %v1685
        %v1687 = vpop.f32.mrf.mxu0
        %1688 = vmatprep.mubr.f32.mxu0 0.0
        %1689 = vmatmul.mubr.f32.gmra.mxu0 %v1483
        %v1690 = vpop.f32.mrf.mxu0
        %v1691 = vadd.f32 %v1369, %v1690
        %v1692 = vpop.f32.mrf.mxu0
        %1693 = vmatprep.mubr.f32.mxu0 0.0
        %1694 = vmatmul.mubr.f32.gmra.mxu0 %v1486
        %v1695 = vpop.f32.mrf.mxu0
        %v1696 = vadd.f32 %v1374, %v1695
        %v1697 = vpop.f32.mrf.mxu0
        %1698 = vmatprep.mubr.f32.mxu0 0.0
        %1699 = vmatmul.mubr.f32.gmra.mxu0 %v1489
        %v1700 = vpop.f32.mrf.mxu0
        %v1701 = vadd.f32 %v1379, %v1700
        %v1702 = vpop.f32.mrf.mxu0
        %1703 = vmatprep.mubr.f32.mxu0 0.0
        %1704 = vmatmul.mubr.f32.gmra.mxu0 %v1492
        %v1705 = vpop.f32.mrf.mxu0
        %v1706 = vadd.f32 %v1384, %v1705
        %v1707 = vpop.f32.mrf.mxu0
        %1708 = vmatprep.mubr.f32.mxu0 0.0
        %1709 = vmatmul.mubr.f32.gmra.mxu0 %v1495
        %v1710 = vpop.f32.mrf.mxu0
        %v1711 = vadd.f32 %v1389, %v1710
        %v1712 = vpop.f32.mrf.mxu0
        %1713 = vmatprep.mubr.f32.mxu0 0.0
        %1714 = vmatmul.mubr.f32.gmra.mxu0 %v1498
        %v1715 = vpop.f32.mrf.mxu0
        %v1716 = vadd.f32 %v1394, %v1715
        %v1717 = vpop.f32.mrf.mxu0
        %1718 = vmatprep.mubr.f32.mxu0 0.0
        %1719 = vmatmul.mubr.f32.gmra.mxu0 %v1501
        %v1720 = vpop.f32.mrf.mxu0
        %v1721 = vadd.f32 %v1399, %v1720
        %v1722 = vpop.f32.mrf.mxu0
        %1723 = vmatprep.mubr.f32.mxu0 0.0
        %1724 = vmatmul.mubr.f32.gmra.mxu0 %v1504
        %v1725 = vpop.f32.mrf.mxu0
        %v1726 = vadd.f32 %v1404, %v1725
        %v1727 = vpop.f32.mrf.mxu0
        %1728 = vmatprep.mubr.f32.mxu0 0.0
        %1729 = vmatmul.mubr.f32.gmra.mxu0 %v1507
        %v1730 = vpop.f32.mrf.mxu0
        %v1731 = vadd.f32 %v1409, %v1730
        %v1732 = vpop.f32.mrf.mxu0
        %1733 = vdwg.mxu0
        %v1734 = vld [vmem:[%s7] sm:$0x1]
        %v1736 = vlaneseq
        %v1737 = vshrl.u32 %v1736, 7
        %v1738 = vsub.s32 0, %v1737
        %v1739 = vrot.slane %v1734, %v1738
        %v1741 = vadd.f32 %v1576, %v1739
        %v1742 = vadd.f32 %v1581, %v1739
        %v1743 = vadd.f32 %v1586, %v1739
        %v1744 = vadd.f32 %v1591, %v1739
        %v1745 = vadd.f32 %v1596, %v1739
        %v1746 = vadd.f32 %v1601, %v1739
        %v1747 = vadd.f32 %v1606, %v1739
        %v1748 = vadd.f32 %v1611, %v1739
        %v1749 = vadd.f32 %v1616, %v1739
        %v1750 = vadd.f32 %v1621, %v1739
        %v1751 = vadd.f32 %v1626, %v1739
        %v1752 = vadd.f32 %v1631, %v1739
        %v1753 = vadd.f32 %v1636, %v1739
        %v1754 = vadd.f32 %v1641, %v1739
        %v1755 = vadd.f32 %v1646, %v1739
        %v1756 = vadd.f32 %v1651, %v1739
        %v1757 = vadd.f32 %v1656, %v1739
        %v1758 = vadd.f32 %v1661, %v1739
        %v1759 = vadd.f32 %v1666, %v1739
        %v1760 = vadd.f32 %v1671, %v1739
        %v1761 = vadd.f32 %v1676, %v1739
        %v1762 = vadd.f32 %v1681, %v1739
        %v1763 = vadd.f32 %v1686, %v1739
        %v1764 = vadd.f32 %v1691, %v1739
        %v1765 = vadd.f32 %v1696, %v1739
        %v1766 = vadd.f32 %v1701, %v1739
        %v1767 = vadd.f32 %v1706, %v1739
        %v1768 = vadd.f32 %v1711, %v1739
        %v1769 = vadd.f32 %v1716, %v1739
        %v1770 = vadd.f32 %v1721, %v1739
        %v1771 = vadd.f32 %v1726, %v1739
        %v1772 = vadd.f32 %v1731, %v1739
        %1773 = vst.msk [vmem:[%s353] sm:$0xff] %vm474, %v1741
        %1774 = vst.msk [vmem:[%s353 + $0x8] sm:$0xff] %vm474, %v1742
        %1775 = vst.msk [vmem:[%s353 + $0x10] sm:$0xff] %vm474, %v1743
        %1776 = vst.msk [vmem:[%s353 + $0x18] sm:$0xff] %vm474, %v1744
        %1777 = vst.msk [vmem:[%s353 + $0x20] sm:$0xff] %vm474, %v1745
        %1778 = vst.msk [vmem:[%s353 + $0x28] sm:$0xff] %vm474, %v1746
        %1779 = vst.msk [vmem:[%s353 + $0x30] sm:$0xff] %vm474, %v1747
        %1780 = vst.msk [vmem:[%s353 + $0x38] sm:$0xff] %vm474, %v1748
        %1781 = vst.msk [vmem:[%s353 + $0x40] sm:$0xff] %vm474, %v1749
        %1782 = vst.msk [vmem:[%s353 + $0x48] sm:$0xff] %vm474, %v1750
        %1783 = vst.msk [vmem:[%s353 + $0x50] sm:$0xff] %vm474, %v1751
        %1784 = vst.msk [vmem:[%s353 + $0x58] sm:$0xff] %vm474, %v1752
        %1785 = vst.msk [vmem:[%s353 + $0x60] sm:$0xff] %vm474, %v1753
        %1786 = vst.msk [vmem:[%s353 + $0x68] sm:$0xff] %vm474, %v1754
        %1787 = vst.msk [vmem:[%s353 + $0x70] sm:$0xff] %vm474, %v1755
        %1788 = vst.msk [vmem:[%s353 + $0x78] sm:$0xff] %vm474, %v1756
        %1789 = vst.msk [vmem:[%s353 + $0x80] sm:$0xff] %vm474, %v1757
        %1790 = vst.msk [vmem:[%s353 + $0x88] sm:$0xff] %vm474, %v1758
        %1791 = vst.msk [vmem:[%s353 + $0x90] sm:$0xff] %vm474, %v1759
        %1792 = vst.msk [vmem:[%s353 + $0x98] sm:$0xff] %vm474, %v1760
        %1793 = vst.msk [vmem:[%s353 + $0xa0] sm:$0xff] %vm474, %v1761
        %1794 = vst.msk [vmem:[%s353 + $0xa8] sm:$0xff] %vm474, %v1762
        %1795 = vst.msk [vmem:[%s353 + $0xb0] sm:$0xff] %vm474, %v1763
        %1796 = vst.msk [vmem:[%s353 + $0xb8] sm:$0xff] %vm474, %v1764
        %1797 = vst.msk [vmem:[%s353 + $0xc0] sm:$0xff] %vm474, %v1765
        %1798 = vst.msk [vmem:[%s353 + $0xc8] sm:$0xff] %vm474, %v1766
        %1799 = vst.msk [vmem:[%s353 + $0xd0] sm:$0xff] %vm474, %v1767
        %1800 = vst.msk [vmem:[%s353 + $0xd8] sm:$0xff] %vm474, %v1768
        %1801 = vst.msk [vmem:[%s353 + $0xe0] sm:$0xff] %vm474, %v1769
        %1802 = vst.msk [vmem:[%s353 + $0xe8] sm:$0xff] %vm474, %v1770
        %1803 = vst.msk [vmem:[%s353 + $0xf0] sm:$0xff] %vm474, %v1771
        %1804 = vst.msk [vmem:[%s353 + $0xf8] sm:$0xff] %vm474, %v1772
        %s1805 = sadd.s32 %s26, %s27
        %s1806 = smul.u32 32, %s1805
        %p1807 = scmp.lt.s32.totalorder %s25, 1
        %s1808 = scalar_select %p1807, %s25, 1
        %p1809 = scmp.lt.s32.totalorder %s1806, 31
        %s1810 = scalar_select %p1809, %s1806, 31
        %s1811 = smul.addr %s1808, 32
        %s1812 = sadd.s32 %s1810, %s1811
        %s1813 = smul.addr %s1812, 8
        %s1814 = scalar_lea.vmem %s8, %s1813
        // Predicated region
        $region61: #{tpu_custom_call.1} parent=51 // pred_check
          %p1815 = pneg %p234
        $region62: #{tpu_custom_call.1} parent=51 // pred_check_branch
          %1817 = sbr.rel (%p1815) target = $region64
        $region63: #{tpu_custom_call.1} parent=51 // pred_region
          %s1818 = sadd.s32 %s26, %s27
          %s1819 = smul.u32 32, %s1818
        $region64: #{tpu_custom_call.1} parent=51 // pred_fallthru
          _
      $region52: #{tpu_custom_call.1} parent=5 // pred_fallthru
        _
      %p1820 = scmp.le.s32.totalorder 2, %s15
      // Predicated region
      $region65: #{tpu_custom_call.1} parent=5 // pred_check
        %p1821 = pneg %p1820
      $region66: #{tpu_custom_call.1} parent=5 // pred_check_branch
        %1823 = sbr.rel (%p1821) target = $region68
      $region67: #{tpu_custom_call.1} parent=5 // pred_region
        %s1824 = ssub.s32 %s15, 2
        // Predicated region
        $region69: #{tpu_custom_call.1} parent=67 // pred_check
          %p1825 = pneg %p240
        $region70: #{tpu_custom_call.1} parent=67 // pred_check_branch
          %1827 = sbr.rel (%p1825) target = $region72
        $region71: #{tpu_custom_call.1} parent=67 // pred_region
          %s1828 = sadd.s32 %s29, %s30
          %s1829 = smul.u32 32, %s1828
          %p1830 = scmp.lt.s32.totalorder %s28, 1
          %s1831 = scalar_select %p1830, %s28, 1
          %p1832 = scmp.lt.s32.totalorder %s1829, 31
          %s1833 = scalar_select %p1832, %s1829, 31
          %s1834 = smul.addr %s1831, 32
          %s1835 = sadd.s32 %s1833, %s1834
          %s1836 = smul.addr %s1835, 8
          %s1837 = scalar_lea.vmem %s8, %s1836
        $region72: #{tpu_custom_call.1} parent=67 // pred_fallthru
          _
      $region68: #{tpu_custom_call.1} parent=5 // pred_fallthru
        _
    $region6: #{tpu_custom_call.1} parent=1 // loop_footer
      %s19 = sadd.s32 1, %s15
    $region7: #{tpu_custom_call.1} parent=1 // loop_footer_branch
      %14 = sbr.rel target = $region3
    $region8: #{tpu_custom_call.1} parent=1 // loop_exit
      _
    %1838 = vsyncpa [#allocation4], 1
    %s1839 = scalar_lea.sflag [#allocation4], 1
    %1840 = vsyncpa %s1839, 1

</llo_original>
